<compile_context>
chip_gen: v7x
topology: tpu7x:2x2x1
jax: 0.10.0
libtpu: 0.0.40
codegen_flags: <defaults>
</compile_context>

<pallas_src>
import functools

import jax
import jax.numpy as jnp
from jax.experimental import pallas as pl
from jax.experimental.pallas import tpu as pltpu

_HI = jax.lax.Precision.HIGHEST


# ---------------------------------------------------------------------------
# Pallas kernel: fused token->gate-preact lookup + bi-LSTM recurrence + FC
# ---------------------------------------------------------------------------
def bilstm_fc_kernel(ids_ref,     # [T*Bp, 4] int32  pre-offset one-hot column ids
                     table_ref,   # [VC, 8H]  f32    fused (embedding @ W_ih) table
                     whh_ref,     # [2H, 8H]  f32    block-diag recurrent weights
                     b_ref,       # [1, 8H]   f32    fused biases (both directions)
                     fcw_ref,     # [2H, Sp]  f32    classifier (lane-padded)
                     fcb_ref,     # [1, Sp]   f32
                     out_ref,     # [Bp, Sp]  f32
                     z_ref):      # scratch [T*Bp, 8H] f32
    TB = ids_ref.shape[0]
    VC = table_ref.shape[0]
    H2 = whh_ref.shape[0]          # 2*H  (stacked fwd|bwd state width)
    H6 = 3 * H2                    # sigmoid columns: gates i|f|o
    Bp = out_ref.shape[0]
    T = TB // Bp

    # --- (1) fused embedding lookup + hoisted input projection -------------
    # Row r = t*Bp + b carries four disjoint-segment ids:
    #   text[b, t] (fwd), TV + text[b, T-1-t] (bwd),
    #   2TV + ner[b, t] (fwd), 2TV+NV + ner[b, T-1-t] (bwd).
    # One MXU matmul then yields the gate pre-activations of BOTH directions
    # for ALL timesteps, already in the paired per-step layout.
    ids = ids_ref[...]
    lane = jax.lax.broadcasted_iota(jnp.int32, (TB, VC), 1)
    hit = ((lane == ids[:, 0:1]) | (lane == ids[:, 1:2]) |
           (lane == ids[:, 2:3]) | (lane == ids[:, 3:4]))
    onehot = jnp.where(hit, jnp.float32(1.0), jnp.float32(0.0))
    # (3) write z to VMEM scratch so it is not pinned in vregs across the unroll.
    z_ref[...] = (jnp.dot(onehot, table_ref[...],
                          preferred_element_type=jnp.float32) + b_ref[...])

    h = jnp.zeros((Bp, H2), jnp.float32)
    c = jnp.zeros((Bp, H2), jnp.float32)

    # --- statically unrolled recurrence over the compile-time T ------------
    for t in range(T):
        # single fused recurrent matmul per step (fwd + bwd together);
        # whh re-read from the ref each step (bounded live range).
        g = z_ref[t * Bp:(t + 1) * Bp, :] + jnp.dot(
            h, whh_ref[...], preferred_element_type=jnp.float32)   # [Bp, 8H]

        # (2) gate order [i | f | o | g]: one sigmoid (via tanh identity) over the
        # contiguous 0:6H block, one tanh over 6H:8H -- half the previous EUP work.
        s = 0.5 * jnp.tanh(0.5 * g[:, :H6]) + 0.5                  # [Bp, 6H]
        g_g = jnp.tanh(g[:, H6:])                                  # [Bp, 2H]
        i_g = s[:, 0:H2]
        f_g = s[:, H2:2 * H2]
        o_g = s[:, 2 * H2:H6]

        c = f_g * c + i_g * g_g
        h = o_g * jnp.tanh(c)

    # h == [h_fwd | h_bwd] already -> straight into the (lane-padded) classifier.
    out_ref[...] = (jnp.dot(h, fcw_ref[...], preferred_element_type=jnp.float32)
                    + fcb_ref[...])


# ---------------------------------------------------------------------------
# One-time parameter fusion (plain JAX; cache the result in real use)
# ---------------------------------------------------------------------------
def _reorder_ifog(m, H):
    """PyTorch gate order (i, f, g, o) -> kernel order (i, f, o, g)."""
    return jnp.concatenate([m[..., :2 * H], m[..., 3 * H:4 * H],
                            m[..., 2 * H:3 * H]], axis=-1)


def _dir_minor(m_f, m_b, H):
    """Interleave per-direction [..., 4H] (i,f,o,g) into [..., 8H] gate-major,
    direction-minor: [i_f i_b | f_f f_b | o_f o_b | g_f g_b]."""
    parts = []
    for k in range(4):
        parts.append(m_f[..., k * H:(k + 1) * H])
        parts.append(m_b[..., k * H:(k + 1) * H])
    return jnp.concatenate(parts, axis=-1)


def build_fused_params(params):
    H = params["whh_f"].shape[0]
    Et = params["text_emb"].shape[1]

    wih_f = _reorder_ifog(params["wih_f"], H)      # [D, 4H]
    wih_b = _reorder_ifog(params["wih_b"], H)
    whh_f = _reorder_ifog(params["whh_f"], H)      # [H, 4H]
    whh_b = _reorder_ifog(params["whh_b"], H)
    b_f = _reorder_ifog(params["b_f"], H)          # [1, 4H]
    b_b = _reorder_ifog(params["b_b"], H)

    dot = lambda a, b: jnp.dot(a, b, precision=_HI)
    # Per-token, per-direction input projections (embedding fused with W_ih).
    zt_f = dot(params["text_emb"], wih_f[:Et])     # [TV, 4H]
    zt_b = dot(params["text_emb"], wih_b[:Et])
    zn_f = dot(params["ner_emb"], wih_f[Et:])      # [NV, 4H]
    zn_b = dot(params["ner_emb"], wih_b[Et:])
    z0t = jnp.zeros_like(zt_f)
    z0n = jnp.zeros_like(zn_f)
    table = jnp.concatenate([
        _dir_minor(zt_f, z0t, H),                  # rows 0..TV-1        text tok, fwd slots
        _dir_minor(z0t, zt_b, H),                  # rows TV..2TV-1      text tok, bwd slots
        _dir_minor(zn_f, z0n, H),                  # rows 2TV..2TV+NV-1  ner tok, fwd slots
        _dir_minor(z0n, zn_b, H),                  # remaining           ner tok, bwd slots
    ], axis=0).astype(jnp.float32)                 # [2*(TV+NV), 8H]

    zH = jnp.zeros((H, 4 * H), jnp.float32)
    whh_blk = _dir_minor(jnp.concatenate([whh_f, zH], axis=0),
                         jnp.concatenate([zH, whh_b], axis=0), H)   # [2H, 8H]
    bias = _dir_minor(b_f, b_b, H)                                  # [1, 8H]

    # (4) lane-dense classifier: pad last dim to 128.
    S = params["fc_b"].shape[-1]
    Sp = max(128, ((S + 127) // 128) * 128)
    fc_w = jnp.zeros((2 * H, Sp), jnp.float32).at[:, :S].set(params["fc_w"])
    fc_b = jnp.zeros((1, Sp), jnp.float32).at[:, :S].set(params["fc_b"])

    return dict(table=table, whh=whh_blk, bias=bias, fc_w=fc_w, fc_b=fc_b)


# ---------------------------------------------------------------------------
# Forward wrapper: tiny int32 id prep + single fused pallas_call
# ---------------------------------------------------------------------------
@functools.partial(jax.jit,
                   static_argnames=("text_vocab", "ner_vocab", "num_classes"))
def sentiment_forward(fused, text, ner_tags, *, text_vocab, ner_vocab, num_classes):
    B, T = text.shape
    Bp = ((B + 7) // 8) * 8                        # (5) pad batch to a sublane group
    TV, NV = text_vocab, ner_vocab

    # Only int32 token-id arrays are prepared outside the kernel (a few ops on
    # <=64 elements, fused by XLA under jit); the f32 embedding slab never exists.
    textp = jnp.pad(text.astype(jnp.int32), ((0, Bp - B), (0, 0)))
    nerp = jnp.pad(ner_tags.astype(jnp.int32), ((0, Bp - B), (0, 0)))
    offs = jnp.array([0, TV, 2 * TV, 2 * TV + NV], jnp.int32)
    tok = jnp.stack([textp, textp[:, ::-1], nerp, nerp[:, ::-1]], axis=-1) + offs  # [Bp, T, 4]
    ids = jnp.transpose(tok, (1, 0, 2)).reshape(T * Bp, 4)                         # row t*Bp + b

    Sp = fused["fc_w"].shape[-1]
    H8 = fused["table"].shape[-1]

    vspec = pl.BlockSpec(memory_space=pltpu.MemorySpace.VMEM)
    out = pl.pallas_call(
        bilstm_fc_kernel,
        out_shape=jax.ShapeDtypeStruct((Bp, Sp), jnp.float32),
        in_specs=[vspec] * 6,
        out_specs=vspec,
        scratch_shapes=[pltpu.VMEM((T * Bp, H8), jnp.float32)],
    )(ids, fused["table"], fused["whh"], fused["bias"], fused["fc_w"], fused["fc_b"])
    return out[:B, :num_classes]


# ---------------------------------------------------------------------------
# Pure-JAX reference (per-direction weights, PyTorch gate order, HIGHEST precision)
# ---------------------------------------------------------------------------
def sentiment_forward_ref(params, text, ner_tags):
    dot = lambda a, b: jnp.dot(a, b, precision=_HI)
    emb_text = jnp.take(params["text_emb"], text, axis=0)
    emb_ner = jnp.take(params["ner_emb"], ner_tags, axis=0)
    x = jnp.concatenate([emb_text, emb_ner], axis=2).astype(jnp.float32)   # [B, T, D]
    B, T, _ = x.shape
    H = params["whh_f"].shape[0]

    def cell(x_t, h, c, wih, whh, b):
        gates = dot(x_t, wih) + dot(h, whh) + b
        i = jax.nn.sigmoid(gates[:, 0 * H:1 * H])
        f = jax.nn.sigmoid(gates[:, 1 * H:2 * H])
        g = jnp.tanh(gates[:, 2 * H:3 * H])
        o = jax.nn.sigmoid(gates[:, 3 * H:4 * H])
        c_new = f * c + i * g
        return o * jnp.tanh(c_new), c_new

    h_f = c_f = h_b = c_b = jnp.zeros((B, H), jnp.float32)
    for t in range(T):
        h_f, c_f = cell(x[:, t, :], h_f, c_f,
                        params["wih_f"], params["whh_f"], params["b_f"])
        h_b, c_b = cell(x[:, T - 1 - t, :], h_b, c_b,
                        params["wih_b"], params["whh_b"], params["b_b"])
    hidden_final = jnp.concatenate([h_f, h_b], axis=1)
    return dot(hidden_final, params["fc_w"]) + params["fc_b"]


# ---------------------------------------------------------------------------
# Deterministic parameter init (synthetic weights; no checkpoint load)
# ---------------------------------------------------------------------------
def init_params(key, text_vocab, text_emb_dim, ner_vocab, ner_emb_dim,
                hidden_dim, sentiment_vocab):
    ks = jax.random.split(key, 12)
    d_in = text_emb_dim + ner_emb_dim
    H = hidden_dim
    s = 1.0 / jnp.sqrt(jnp.float32(H))

    text_emb = jax.random.normal(ks[0], (text_vocab, text_emb_dim), jnp.float32)
    text_emb = text_emb.at[0].set(0.0)        # padding_idx=0
    ner_emb = jax.random.normal(ks[1], (ner_vocab, ner_emb_dim), jnp.float32)
    ner_emb = ner_emb.at[0].set(0.0)          # padding_idx=0

    def u(k, shape):
        return jax.random.uniform(k, shape, jnp.float32, -s, s)

    return dict(
        text_emb=text_emb,
        ner_emb=ner_emb,
        # forward direction (pre-transposed: [in, 4H] / [H, 4H], PyTorch i,f,g,o order)
        wih_f=u(ks[2], (d_in, 4 * H)),
        whh_f=u(ks[3], (H, 4 * H)),
        b_f=u(ks[4], (1, 4 * H)) + u(ks[5], (1, 4 * H)),   # b_ih + b_hh fused
        # backward direction
        wih_b=u(ks[6], (d_in, 4 * H)),
        whh_b=u(ks[7], (H, 4 * H)),
        b_b=u(ks[8], (1, 4 * H)) + u(ks[9], (1, 4 * H)),
        # final classifier (first H rows correspond to the forward hidden)
        fc_w=u(ks[10], (2 * H, sentiment_vocab)),
        fc_b=u(ks[11], (1, sentiment_vocab)),
    )


if __name__ == "__main__":
    # Small shapes consistent with the module's forward
    B, T = 2, 8
    TEXT_VOCAB, TEXT_EMB = 50, 16
    NER_VOCAB, NER_EMB = 10, 16
    HIDDEN, SENT_VOCAB = 32, 4

    key = jax.random.PRNGKey(0)
    k_params, k_text, k_ner = jax.random.split(key, 3)

    params = init_params(k_params, TEXT_VOCAB, TEXT_EMB, NER_VOCAB, NER_EMB,
                         HIDDEN, SENT_VOCAB)
    text = jax.random.randint(k_text, (B, T), 0, TEXT_VOCAB, dtype=jnp.int32)
    ner_tags = jax.random.randint(k_ner, (B, T), 0, NER_VOCAB, dtype=jnp.int32)

    fused = build_fused_params(params)            # one-time weight fusion
    out = sentiment_forward(fused, text, ner_tags,
                            text_vocab=TEXT_VOCAB, ner_vocab=NER_VOCAB,
                            num_classes=SENT_VOCAB)
    out = jax.block_until_ready(out)

    ref = sentiment_forward_ref(params, text, ner_tags)
    assert out.shape == (B, SENT_VOCAB)
    max_err = float(jnp.max(jnp.abs(out - ref)))
    # Tightened from 1e-2 (review). Not 1e-5: the in-kernel f32 MXU pass structure is
    # not guaranteed bit-identical to the Precision.HIGHEST XLA reference dots.
    assert jnp.allclose(out, ref, rtol=2e-3, atol=2e-3), \
        f"mismatch vs reference (max abs err {max_err})"
    print("KERNEL_OK")
</pallas_src>

<mosaic_0001>
module attributes {stable_mosaic.version = 11 : i64} {
  func.func @bilstm_fc_kernel(%arg0: memref<64x4xi32, #tpu.memory_space<vmem>>, %arg1: memref<120x256xf32, #tpu.memory_space<vmem>>, %arg2: memref<64x256xf32, #tpu.memory_space<vmem>>, %arg3: memref<1x256xf32, #tpu.memory_space<vmem>>, %arg4: memref<64x128xf32, #tpu.memory_space<vmem>>, %arg5: memref<1x128xf32, #tpu.memory_space<vmem>>, %arg6: memref<8x128xf32, #tpu.memory_space<vmem>>, %arg7: memref<64x256xf32, #tpu.memory_space<vmem>>) attributes {dimension_semantics = [], scalar_prefetch = 0 : i64, scratch_operands = 1 : i64, tpu.core_type = #tpu.core_type<tc>} {
    %c0 = arith.constant 0 : index
    %c0_0 = arith.constant 0 : index
    %0 = vector.load %arg0[%c0, %c0_0] : memref<64x4xi32, #tpu.memory_space<vmem>>, vector<64x4xi32>
    %1 = tpu.iota {dimensions = array<i32: 1>} : vector<64x120xi32>
    %2 = vector.extract_strided_slice %0 {offsets = [0, 0], sizes = [64, 1], strides = [1, 1]} : vector<64x4xi32> to vector<64x1xi32>
    %3 = vector.broadcast %2 : vector<64x1xi32> to vector<64x120xi32>
    %4 = arith.cmpi eq, %1, %3 : vector<64x120xi32>
    %5 = vector.extract_strided_slice %0 {offsets = [0, 1], sizes = [64, 1], strides = [1, 1]} : vector<64x4xi32> to vector<64x1xi32>
    %6 = vector.broadcast %5 : vector<64x1xi32> to vector<64x120xi32>
    %7 = arith.cmpi eq, %1, %6 : vector<64x120xi32>
    %8 = arith.ori %4, %7 : vector<64x120xi1>
    %9 = vector.extract_strided_slice %0 {offsets = [0, 2], sizes = [64, 1], strides = [1, 1]} : vector<64x4xi32> to vector<64x1xi32>
    %10 = vector.broadcast %9 : vector<64x1xi32> to vector<64x120xi32>
    %11 = arith.cmpi eq, %1, %10 : vector<64x120xi32>
    %12 = arith.ori %8, %11 : vector<64x120xi1>
    %13 = vector.extract_strided_slice %0 {offsets = [0, 3], sizes = [64, 1], strides = [1, 1]} : vector<64x4xi32> to vector<64x1xi32>
    %14 = vector.broadcast %13 : vector<64x1xi32> to vector<64x120xi32>
    %15 = arith.cmpi eq, %1, %14 : vector<64x120xi32>
    %16 = arith.ori %12, %15 : vector<64x120xi1>
    %cst = arith.constant 1.000000e+00 : f32
    %cst_1 = arith.constant 0.000000e+00 : f32
    %17 = vector.broadcast %cst : f32 to vector<64x120xf32>
    %18 = vector.broadcast %cst_1 : f32 to vector<64x120xf32>
    %19 = arith.select %16, %17, %18 : vector<64x120xi1>, vector<64x120xf32>
    %c0_2 = arith.constant 0 : index
    %c0_3 = arith.constant 0 : index
    %20 = vector.load %arg1[%c0_2, %c0_3] : memref<120x256xf32, #tpu.memory_space<vmem>>, vector<120x256xf32>
    %cst_4 = arith.constant dense<0.000000e+00> : vector<64x256xf32>
    %21 = tpu.matmul %19, %20, %cst_4 {dimension_numbers = #tpu.dot_dimension_numbers<[1], [0], [0], [1], [0, 0, 1, 1], [], []>} : vector<64x120xf32>, vector<120x256xf32>, vector<64x256xf32> -> vector<64x256xf32>
    %c0_5 = arith.constant 0 : index
    %c0_6 = arith.constant 0 : index
    %22 = vector.load %arg3[%c0_5, %c0_6] : memref<1x256xf32, #tpu.memory_space<vmem>>, vector<1x256xf32>
    %23 = vector.broadcast %22 : vector<1x256xf32> to vector<64x256xf32>
    %24 = arith.addf %21, %23 : vector<64x256xf32>
    %c0_7 = arith.constant 0 : index
    %c0_8 = arith.constant 0 : index
    %25 = vector.load %arg7[%c0_7, %c0_8] : memref<64x256xf32, #tpu.memory_space<vmem>>, vector<64x256xf32>
    tpu.vector_store %arg7[%c0_7, %c0_8], %24 {strides = array<i32>} : memref<64x256xf32, #tpu.memory_space<vmem>>, vector<64x256xf32>,
    %cst_9 = arith.constant 0.000000e+00 : f32
    %26 = vector.broadcast %cst_9 : f32 to vector<8x64xf32>
    %cst_10 = arith.constant 0.000000e+00 : f32
    %27 = vector.broadcast %cst_10 : f32 to vector<8x64xf32>
    %c0_11 = arith.constant 0 : index
    %c0_12 = arith.constant 0 : index
    %28 = vector.load %arg7[%c0_11, %c0_12] : memref<64x256xf32, #tpu.memory_space<vmem>>, vector<8x256xf32>
    %c0_13 = arith.constant 0 : index
    %c0_14 = arith.constant 0 : index
    %29 = vector.load %arg2[%c0_13, %c0_14] : memref<64x256xf32, #tpu.memory_space<vmem>>, vector<64x256xf32>
    %cst_15 = arith.constant dense<0.000000e+00> : vector<8x256xf32>
    %30 = tpu.matmul %26, %29, %cst_15 {dimension_numbers = #tpu.dot_dimension_numbers<[1], [0], [0], [1], [0, 0, 1, 1], [], []>} : vector<8x64xf32>, vector<64x256xf32>, vector<8x256xf32> -> vector<8x256xf32>
    %31 = arith.addf %28, %30 : vector<8x256xf32>
    %32 = vector.extract_strided_slice %31 {offsets = [0, 0], sizes = [8, 192], strides = [1, 1]} : vector<8x256xf32> to vector<8x192xf32>
    %cst_16 = arith.constant 5.000000e-01 : f32
    %33 = vector.broadcast %cst_16 : f32 to vector<8x192xf32>
    %34 = arith.mulf %33, %32 : vector<8x192xf32>
    %35 = math.tanh %34 : vector<8x192xf32>
    %cst_17 = arith.constant 5.000000e-01 : f32
    %36 = vector.broadcast %cst_17 : f32 to vector<8x192xf32>
    %37 = arith.mulf %36, %35 : vector<8x192xf32>
    %cst_18 = arith.constant 5.000000e-01 : f32
    %38 = vector.broadcast %cst_18 : f32 to vector<8x192xf32>
    %39 = arith.addf %37, %38 : vector<8x192xf32>
    %40 = vector.extract_strided_slice %31 {offsets = [0, 192], sizes = [8, 64], strides = [1, 1]} : vector<8x256xf32> to vector<8x64xf32>
    %41 = math.tanh %40 : vector<8x64xf32>
    %42 = vector.extract_strided_slice %39 {offsets = [0, 0], sizes = [8, 64], strides = [1, 1]} : vector<8x192xf32> to vector<8x64xf32>
    %43 = vector.extract_strided_slice %39 {offsets = [0, 64], sizes = [8, 64], strides = [1, 1]} : vector<8x192xf32> to vector<8x64xf32>
    %44 = vector.extract_strided_slice %39 {offsets = [0, 128], sizes = [8, 64], strides = [1, 1]} : vector<8x192xf32> to vector<8x64xf32>
    %45 = arith.mulf %43, %27 : vector<8x64xf32>
    %46 = arith.mulf %42, %41 : vector<8x64xf32>
    %47 = arith.addf %45, %46 : vector<8x64xf32>
    %48 = math.tanh %47 : vector<8x64xf32>
    %49 = arith.mulf %44, %48 : vector<8x64xf32>
    %c8 = arith.constant 8 : index
    %c0_19 = arith.constant 0 : index
    %50 = vector.load %arg7[%c8, %c0_19] : memref<64x256xf32, #tpu.memory_space<vmem>>, vector<8x256xf32>
    %c0_20 = arith.constant 0 : index
    %c0_21 = arith.constant 0 : index
    %51 = vector.load %arg2[%c0_20, %c0_21] : memref<64x256xf32, #tpu.memory_space<vmem>>, vector<64x256xf32>
    %cst_22 = arith.constant dense<0.000000e+00> : vector<8x256xf32>
    %52 = tpu.matmul %49, %51, %cst_22 {dimension_numbers = #tpu.dot_dimension_numbers<[1], [0], [0], [1], [0, 0, 1, 1], [], []>} : vector<8x64xf32>, vector<64x256xf32>, vector<8x256xf32> -> vector<8x256xf32>
    %53 = arith.addf %50, %52 : vector<8x256xf32>
    %54 = vector.extract_strided_slice %53 {offsets = [0, 0], sizes = [8, 192], strides = [1, 1]} : vector<8x256xf32> to vector<8x192xf32>
    %cst_23 = arith.constant 5.000000e-01 : f32
    %55 = vector.broadcast %cst_23 : f32 to vector<8x192xf32>
    %56 = arith.mulf %55, %54 : vector<8x192xf32>
    %57 = math.tanh %56 : vector<8x192xf32>
    %cst_24 = arith.constant 5.000000e-01 : f32
    %58 = vector.broadcast %cst_24 : f32 to vector<8x192xf32>
    %59 = arith.mulf %58, %57 : vector<8x192xf32>
    %cst_25 = arith.constant 5.000000e-01 : f32
    %60 = vector.broadcast %cst_25 : f32 to vector<8x192xf32>
    %61 = arith.addf %59, %60 : vector<8x192xf32>
    %62 = vector.extract_strided_slice %53 {offsets = [0, 192], sizes = [8, 64], strides = [1, 1]} : vector<8x256xf32> to vector<8x64xf32>
    %63 = math.tanh %62 : vector<8x64xf32>
    %64 = vector.extract_strided_slice %61 {offsets = [0, 0], sizes = [8, 64], strides = [1, 1]} : vector<8x192xf32> to vector<8x64xf32>
    %65 = vector.extract_strided_slice %61 {offsets = [0, 64], sizes = [8, 64], strides = [1, 1]} : vector<8x192xf32> to vector<8x64xf32>
    %66 = vector.extract_strided_slice %61 {offsets = [0, 128], sizes = [8, 64], strides = [1, 1]} : vector<8x192xf32> to vector<8x64xf32>
    %67 = arith.mulf %65, %47 : vector<8x64xf32>
    %68 = arith.mulf %64, %63 : vector<8x64xf32>
    %69 = arith.addf %67, %68 : vector<8x64xf32>
    %70 = math.tanh %69 : vector<8x64xf32>
    %71 = arith.mulf %66, %70 : vector<8x64xf32>
    %c16 = arith.constant 16 : index
    %c0_26 = arith.constant 0 : index
    %72 = vector.load %arg7[%c16, %c0_26] : memref<64x256xf32, #tpu.memory_space<vmem>>, vector<8x256xf32>
    %c0_27 = arith.constant 0 : index
    %c0_28 = arith.constant 0 : index
    %73 = vector.load %arg2[%c0_27, %c0_28] : memref<64x256xf32, #tpu.memory_space<vmem>>, vector<64x256xf32>
    %cst_29 = arith.constant dense<0.000000e+00> : vector<8x256xf32>
    %74 = tpu.matmul %71, %73, %cst_29 {dimension_numbers = #tpu.dot_dimension_numbers<[1], [0], [0], [1], [0, 0, 1, 1], [], []>} : vector<8x64xf32>, vector<64x256xf32>, vector<8x256xf32> -> vector<8x256xf32>
    %75 = arith.addf %72, %74 : vector<8x256xf32>
    %76 = vector.extract_strided_slice %75 {offsets = [0, 0], sizes = [8, 192], strides = [1, 1]} : vector<8x256xf32> to vector<8x192xf32>
    %cst_30 = arith.constant 5.000000e-01 : f32
    %77 = vector.broadcast %cst_30 : f32 to vector<8x192xf32>
    %78 = arith.mulf %77, %76 : vector<8x192xf32>
    %79 = math.tanh %78 : vector<8x192xf32>
    %cst_31 = arith.constant 5.000000e-01 : f32
    %80 = vector.broadcast %cst_31 : f32 to vector<8x192xf32>
    %81 = arith.mulf %80, %79 : vector<8x192xf32>
    %cst_32 = arith.constant 5.000000e-01 : f32
    %82 = vector.broadcast %cst_32 : f32 to vector<8x192xf32>
    %83 = arith.addf %81, %82 : vector<8x192xf32>
    %84 = vector.extract_strided_slice %75 {offsets = [0, 192], sizes = [8, 64], strides = [1, 1]} : vector<8x256xf32> to vector<8x64xf32>
    %85 = math.tanh %84 : vector<8x64xf32>
    %86 = vector.extract_strided_slice %83 {offsets = [0, 0], sizes = [8, 64], strides = [1, 1]} : vector<8x192xf32> to vector<8x64xf32>
    %87 = vector.extract_strided_slice %83 {offsets = [0, 64], sizes = [8, 64], strides = [1, 1]} : vector<8x192xf32> to vector<8x64xf32>
    %88 = vector.extract_strided_slice %83 {offsets = [0, 128], sizes = [8, 64], strides = [1, 1]} : vector<8x192xf32> to vector<8x64xf32>
    %89 = arith.mulf %87, %69 : vector<8x64xf32>
    %90 = arith.mulf %86, %85 : vector<8x64xf32>
    %91 = arith.addf %89, %90 : vector<8x64xf32>
    %92 = math.tanh %91 : vector<8x64xf32>
    %93 = arith.mulf %88, %92 : vector<8x64xf32>
    %c24 = arith.constant 24 : index
    %c0_33 = arith.constant 0 : index
    %94 = vector.load %arg7[%c24, %c0_33] : memref<64x256xf32, #tpu.memory_space<vmem>>, vector<8x256xf32>
    %c0_34 = arith.constant 0 : index
    %c0_35 = arith.constant 0 : index
    %95 = vector.load %arg2[%c0_34, %c0_35] : memref<64x256xf32, #tpu.memory_space<vmem>>, vector<64x256xf32>
    %cst_36 = arith.constant dense<0.000000e+00> : vector<8x256xf32>
    %96 = tpu.matmul %93, %95, %cst_36 {dimension_numbers = #tpu.dot_dimension_numbers<[1], [0], [0], [1], [0, 0, 1, 1], [], []>} : vector<8x64xf32>, vector<64x256xf32>, vector<8x256xf32> -> vector<8x256xf32>
    %97 = arith.addf %94, %96 : vector<8x256xf32>
    %98 = vector.extract_strided_slice %97 {offsets = [0, 0], sizes = [8, 192], strides = [1, 1]} : vector<8x256xf32> to vector<8x192xf32>
    %cst_37 = arith.constant 5.000000e-01 : f32
    %99 = vector.broadcast %cst_37 : f32 to vector<8x192xf32>
    %100 = arith.mulf %99, %98 : vector<8x192xf32>
    %101 = math.tanh %100 : vector<8x192xf32>
    %cst_38 = arith.constant 5.000000e-01 : f32
    %102 = vector.broadcast %cst_38 : f32 to vector<8x192xf32>
    %103 = arith.mulf %102, %101 : vector<8x192xf32>
    %cst_39 = arith.constant 5.000000e-01 : f32
    %104 = vector.broadcast %cst_39 : f32 to vector<8x192xf32>
    %105 = arith.addf %103, %104 : vector<8x192xf32>
    %106 = vector.extract_strided_slice %97 {offsets = [0, 192], sizes = [8, 64], strides = [1, 1]} : vector<8x256xf32> to vector<8x64xf32>
    %107 = math.tanh %106 : vector<8x64xf32>
    %108 = vector.extract_strided_slice %105 {offsets = [0, 0], sizes = [8, 64], strides = [1, 1]} : vector<8x192xf32> to vector<8x64xf32>
    %109 = vector.extract_strided_slice %105 {offsets = [0, 64], sizes = [8, 64], strides = [1, 1]} : vector<8x192xf32> to vector<8x64xf32>
    %110 = vector.extract_strided_slice %105 {offsets = [0, 128], sizes = [8, 64], strides = [1, 1]} : vector<8x192xf32> to vector<8x64xf32>
    %111 = arith.mulf %109, %91 : vector<8x64xf32>
    %112 = arith.mulf %108, %107 : vector<8x64xf32>
    %113 = arith.addf %111, %112 : vector<8x64xf32>
    %114 = math.tanh %113 : vector<8x64xf32>
    %115 = arith.mulf %110, %114 : vector<8x64xf32>
    %c32 = arith.constant 32 : index
    %c0_40 = arith.constant 0 : index
    %116 = vector.load %arg7[%c32, %c0_40] : memref<64x256xf32, #tpu.memory_space<vmem>>, vector<8x256xf32>
    %c0_41 = arith.constant 0 : index
    %c0_42 = arith.constant 0 : index
    %117 = vector.load %arg2[%c0_41, %c0_42] : memref<64x256xf32, #tpu.memory_space<vmem>>, vector<64x256xf32>
    %cst_43 = arith.constant dense<0.000000e+00> : vector<8x256xf32>
    %118 = tpu.matmul %115, %117, %cst_43 {dimension_numbers = #tpu.dot_dimension_numbers<[1], [0], [0], [1], [0, 0, 1, 1], [], []>} : vector<8x64xf32>, vector<64x256xf32>, vector<8x256xf32> -> vector<8x256xf32>
    %119 = arith.addf %116, %118 : vector<8x256xf32>
    %120 = vector.extract_strided_slice %119 {offsets = [0, 0], sizes = [8, 192], strides = [1, 1]} : vector<8x256xf32> to vector<8x192xf32>
    %cst_44 = arith.constant 5.000000e-01 : f32
    %121 = vector.broadcast %cst_44 : f32 to vector<8x192xf32>
    %122 = arith.mulf %121, %120 : vector<8x192xf32>
    %123 = math.tanh %122 : vector<8x192xf32>
    %cst_45 = arith.constant 5.000000e-01 : f32
    %124 = vector.broadcast %cst_45 : f32 to vector<8x192xf32>
    %125 = arith.mulf %124, %123 : vector<8x192xf32>
    %cst_46 = arith.constant 5.000000e-01 : f32
    %126 = vector.broadcast %cst_46 : f32 to vector<8x192xf32>
    %127 = arith.addf %125, %126 : vector<8x192xf32>
    %128 = vector.extract_strided_slice %119 {offsets = [0, 192], sizes = [8, 64], strides = [1, 1]} : vector<8x256xf32> to vector<8x64xf32>
    %129 = math.tanh %128 : vector<8x64xf32>
    %130 = vector.extract_strided_slice %127 {offsets = [0, 0], sizes = [8, 64], strides = [1, 1]} : vector<8x192xf32> to vector<8x64xf32>
    %131 = vector.extract_strided_slice %127 {offsets = [0, 64], sizes = [8, 64], strides = [1, 1]} : vector<8x192xf32> to vector<8x64xf32>
    %132 = vector.extract_strided_slice %127 {offsets = [0, 128], sizes = [8, 64], strides = [1, 1]} : vector<8x192xf32> to vector<8x64xf32>
    %133 = arith.mulf %131, %113 : vector<8x64xf32>
    %134 = arith.mulf %130, %129 : vector<8x64xf32>
    %135 = arith.addf %133, %134 : vector<8x64xf32>
    %136 = math.tanh %135 : vector<8x64xf32>
    %137 = arith.mulf %132, %136 : vector<8x64xf32>
    %c40 = arith.constant 40 : index
    %c0_47 = arith.constant 0 : index
    %138 = vector.load %arg7[%c40, %c0_47] : memref<64x256xf32, #tpu.memory_space<vmem>>, vector<8x256xf32>
    %c0_48 = arith.constant 0 : index
    %c0_49 = arith.constant 0 : index
    %139 = vector.load %arg2[%c0_48, %c0_49] : memref<64x256xf32, #tpu.memory_space<vmem>>, vector<64x256xf32>
    %cst_50 = arith.constant dense<0.000000e+00> : vector<8x256xf32>
    %140 = tpu.matmul %137, %139, %cst_50 {dimension_numbers = #tpu.dot_dimension_numbers<[1], [0], [0], [1], [0, 0, 1, 1], [], []>} : vector<8x64xf32>, vector<64x256xf32>, vector<8x256xf32> -> vector<8x256xf32>
    %141 = arith.addf %138, %140 : vector<8x256xf32>
    %142 = vector.extract_strided_slice %141 {offsets = [0, 0], sizes = [8, 192], strides = [1, 1]} : vector<8x256xf32> to vector<8x192xf32>
    %cst_51 = arith.constant 5.000000e-01 : f32
    %143 = vector.broadcast %cst_51 : f32 to vector<8x192xf32>
    %144 = arith.mulf %143, %142 : vector<8x192xf32>
    %145 = math.tanh %144 : vector<8x192xf32>
    %cst_52 = arith.constant 5.000000e-01 : f32
    %146 = vector.broadcast %cst_52 : f32 to vector<8x192xf32>
    %147 = arith.mulf %146, %145 : vector<8x192xf32>
    %cst_53 = arith.constant 5.000000e-01 : f32
    %148 = vector.broadcast %cst_53 : f32 to vector<8x192xf32>
    %149 = arith.addf %147, %148 : vector<8x192xf32>
    %150 = vector.extract_strided_slice %141 {offsets = [0, 192], sizes = [8, 64], strides = [1, 1]} : vector<8x256xf32> to vector<8x64xf32>
    %151 = math.tanh %150 : vector<8x64xf32>
    %152 = vector.extract_strided_slice %149 {offsets = [0, 0], sizes = [8, 64], strides = [1, 1]} : vector<8x192xf32> to vector<8x64xf32>
    %153 = vector.extract_strided_slice %149 {offsets = [0, 64], sizes = [8, 64], strides = [1, 1]} : vector<8x192xf32> to vector<8x64xf32>
    %154 = vector.extract_strided_slice %149 {offsets = [0, 128], sizes = [8, 64], strides = [1, 1]} : vector<8x192xf32> to vector<8x64xf32>
    %155 = arith.mulf %153, %135 : vector<8x64xf32>
    %156 = arith.mulf %152, %151 : vector<8x64xf32>
    %157 = arith.addf %155, %156 : vector<8x64xf32>
    %158 = math.tanh %157 : vector<8x64xf32>
    %159 = arith.mulf %154, %158 : vector<8x64xf32>
    %c48 = arith.constant 48 : index
    %c0_54 = arith.constant 0 : index
    %160 = vector.load %arg7[%c48, %c0_54] : memref<64x256xf32, #tpu.memory_space<vmem>>, vector<8x256xf32>
    %c0_55 = arith.constant 0 : index
    %c0_56 = arith.constant 0 : index
    %161 = vector.load %arg2[%c0_55, %c0_56] : memref<64x256xf32, #tpu.memory_space<vmem>>, vector<64x256xf32>
    %cst_57 = arith.constant dense<0.000000e+00> : vector<8x256xf32>
    %162 = tpu.matmul %159, %161, %cst_57 {dimension_numbers = #tpu.dot_dimension_numbers<[1], [0], [0], [1], [0, 0, 1, 1], [], []>} : vector<8x64xf32>, vector<64x256xf32>, vector<8x256xf32> -> vector<8x256xf32>
    %163 = arith.addf %160, %162 : vector<8x256xf32>
    %164 = vector.extract_strided_slice %163 {offsets = [0, 0], sizes = [8, 192], strides = [1, 1]} : vector<8x256xf32> to vector<8x192xf32>
    %cst_58 = arith.constant 5.000000e-01 : f32
    %165 = vector.broadcast %cst_58 : f32 to vector<8x192xf32>
    %166 = arith.mulf %165, %164 : vector<8x192xf32>
    %167 = math.tanh %166 : vector<8x192xf32>
    %cst_59 = arith.constant 5.000000e-01 : f32
    %168 = vector.broadcast %cst_59 : f32 to vector<8x192xf32>
    %169 = arith.mulf %168, %167 : vector<8x192xf32>
    %cst_60 = arith.constant 5.000000e-01 : f32
    %170 = vector.broadcast %cst_60 : f32 to vector<8x192xf32>
    %171 = arith.addf %169, %170 : vector<8x192xf32>
    %172 = vector.extract_strided_slice %163 {offsets = [0, 192], sizes = [8, 64], strides = [1, 1]} : vector<8x256xf32> to vector<8x64xf32>
    %173 = math.tanh %172 : vector<8x64xf32>
    %174 = vector.extract_strided_slice %171 {offsets = [0, 0], sizes = [8, 64], strides = [1, 1]} : vector<8x192xf32> to vector<8x64xf32>
    %175 = vector.extract_strided_slice %171 {offsets = [0, 64], sizes = [8, 64], strides = [1, 1]} : vector<8x192xf32> to vector<8x64xf32>
    %176 = vector.extract_strided_slice %171 {offsets = [0, 128], sizes = [8, 64], strides = [1, 1]} : vector<8x192xf32> to vector<8x64xf32>
    %177 = arith.mulf %175, %157 : vector<8x64xf32>
    %178 = arith.mulf %174, %173 : vector<8x64xf32>
    %179 = arith.addf %177, %178 : vector<8x64xf32>
    %180 = math.tanh %179 : vector<8x64xf32>
    %181 = arith.mulf %176, %180 : vector<8x64xf32>
    %c56 = arith.constant 56 : index
    %c0_61 = arith.constant 0 : index
    %182 = vector.load %arg7[%c56, %c0_61] : memref<64x256xf32, #tpu.memory_space<vmem>>, vector<8x256xf32>
    %c0_62 = arith.constant 0 : index
    %c0_63 = arith.constant 0 : index
    %183 = vector.load %arg2[%c0_62, %c0_63] : memref<64x256xf32, #tpu.memory_space<vmem>>, vector<64x256xf32>
    %cst_64 = arith.constant dense<0.000000e+00> : vector<8x256xf32>
    %184 = tpu.matmul %181, %183, %cst_64 {dimension_numbers = #tpu.dot_dimension_numbers<[1], [0], [0], [1], [0, 0, 1, 1], [], []>} : vector<8x64xf32>, vector<64x256xf32>, vector<8x256xf32> -> vector<8x256xf32>
    %185 = arith.addf %182, %184 : vector<8x256xf32>
    %186 = vector.extract_strided_slice %185 {offsets = [0, 0], sizes = [8, 192], strides = [1, 1]} : vector<8x256xf32> to vector<8x192xf32>
    %cst_65 = arith.constant 5.000000e-01 : f32
    %187 = vector.broadcast %cst_65 : f32 to vector<8x192xf32>
    %188 = arith.mulf %187, %186 : vector<8x192xf32>
    %189 = math.tanh %188 : vector<8x192xf32>
    %cst_66 = arith.constant 5.000000e-01 : f32
    %190 = vector.broadcast %cst_66 : f32 to vector<8x192xf32>
    %191 = arith.mulf %190, %189 : vector<8x192xf32>
    %cst_67 = arith.constant 5.000000e-01 : f32
    %192 = vector.broadcast %cst_67 : f32 to vector<8x192xf32>
    %193 = arith.addf %191, %192 : vector<8x192xf32>
    %194 = vector.extract_strided_slice %185 {offsets = [0, 192], sizes = [8, 64], strides = [1, 1]} : vector<8x256xf32> to vector<8x64xf32>
    %195 = math.tanh %194 : vector<8x64xf32>
    %196 = vector.extract_strided_slice %193 {offsets = [0, 0], sizes = [8, 64], strides = [1, 1]} : vector<8x192xf32> to vector<8x64xf32>
    %197 = vector.extract_strided_slice %193 {offsets = [0, 64], sizes = [8, 64], strides = [1, 1]} : vector<8x192xf32> to vector<8x64xf32>
    %198 = vector.extract_strided_slice %193 {offsets = [0, 128], sizes = [8, 64], strides = [1, 1]} : vector<8x192xf32> to vector<8x64xf32>
    %199 = arith.mulf %197, %179 : vector<8x64xf32>
    %200 = arith.mulf %196, %195 : vector<8x64xf32>
    %201 = arith.addf %199, %200 : vector<8x64xf32>
    %202 = math.tanh %201 : vector<8x64xf32>
    %203 = arith.mulf %198, %202 : vector<8x64xf32>
    %c0_68 = arith.constant 0 : index
    %c0_69 = arith.constant 0 : index
    %204 = vector.load %arg4[%c0_68, %c0_69] : memref<64x128xf32, #tpu.memory_space<vmem>>, vector<64x128xf32>
    %cst_70 = arith.constant dense<0.000000e+00> : vector<8x128xf32>
    %205 = tpu.matmul %203, %204, %cst_70 {dimension_numbers = #tpu.dot_dimension_numbers<[1], [0], [0], [1], [0, 0, 1, 1], [], []>} : vector<8x64xf32>, vector<64x128xf32>, vector<8x128xf32> -> vector<8x128xf32>
    %c0_71 = arith.constant 0 : index
    %c0_72 = arith.constant 0 : index
    %206 = vector.load %arg5[%c0_71, %c0_72] : memref<1x128xf32, #tpu.memory_space<vmem>>, vector<1x128xf32>
    %207 = vector.broadcast %206 : vector<1x128xf32> to vector<8x128xf32>
    %208 = arith.addf %205, %207 : vector<8x128xf32>
    %c0_73 = arith.constant 0 : index
    %c0_74 = arith.constant 0 : index
    %209 = vector.load %arg6[%c0_73, %c0_74] : memref<8x128xf32, #tpu.memory_space<vmem>>, vector<8x128xf32>
    tpu.vector_store %arg6[%c0_73, %c0_74], %208 {strides = array<i32>} : memref<8x128xf32, #tpu.memory_space<vmem>>, vector<8x128xf32>,
    return
  }
}

</mosaic_0001>

<llo_original>
// kernel: sentiment_forward.1
$region0: #{sentiment_forward.1}
  #allocation0 [shape = 'u32[]', space=smem, size = 0x4, offset = 0x4, fixed_abs, tag = 'smem constant byte address 0x4 - core index']
  #allocation1 [shape = 'u32[144,128]{1,0:T(1,128)}', space=vmem, size = 0x12000, scoped, tag = 'internal scratch']
  #allocation2 [shape = 'f32[64,256]{1,0:T(8,128)}', space=vmem, size = 0x10000, scoped, tag = 'scratch operand']
  %s0 = inlined_call_operand.vmem [shape: s32[64,4], index: 0, kind: input, shape index: {}]
  %s1 = inlined_call_operand.vmem [shape: f32[120,256], index: 1, kind: input, shape index: {}]
  %s2 = inlined_call_operand.hbm [shape: f32[64,256], index: 2, kind: input, shape index: {}]
  %s3 = inlined_call_operand.vmem [shape: f32[1,256], index: 3, kind: input, shape index: {}]
  %s4 = inlined_call_operand.hbm [shape: f32[64,128], index: 4, kind: input, shape index: {}]
  %s5 = inlined_call_operand.vmem [shape: f32[1,128], index: 5, kind: input, shape index: {}]
  %s6 = inlined_call_operand.vmem [shape: f32[8,128], index: 6, kind: output, shape index: {}]
  %s7 = sld [smem:[#allocation0]]
  $region42: #{sentiment_forward.1} parent=0
    _
  %s9 = ssub.s32 1, %s7
  %s10 = scalar_select 0, %s9, %s7
  $region1: #{sentiment_forward.1} parent=0
    #allocation3 [shape = 'u8[65536]{0}', space=vmem, size = 0x10000, scoped, tag = 'input window, operand 2, single buffered']
    #allocation4 [shape = 's32[1]{0}', space=sflag, size = 0x4, scoped, tag = 'scoped memory for sentiment_forward.1']
    #allocation5 [shape = 'u8[32768]{0}', space=vmem, size = 0x8000, scoped, tag = 'input window, operand 4, single buffered']
    #allocation6 [shape = 's32[1]{0}', space=sflag, size = 0x4, scoped, tag = 'scoped memory for sentiment_forward.1']
    %11 = vsyncpa [#allocation4], 0
    %12 = vsyncpa [#allocation6], 0
    // Predicated region
    $region2: #{sentiment_forward.1} parent=1 // pred_check
      _
    $region3: #{sentiment_forward.1} parent=1 // pred_check_branch
      %14 = sbr.rel (0) target = $region5
    $region4: #{sentiment_forward.1} parent=1 // pred_region
      _
    $region5: #{sentiment_forward.1} parent=1 // pred_fallthru
      _
    // Predicated region
    $region6: #{sentiment_forward.1} parent=1 // pred_check
      _
    $region7: #{sentiment_forward.1} parent=1 // pred_check_branch
      %16 = sbr.rel (0) target = $region9
    $region8: #{sentiment_forward.1} parent=1 // pred_region
      _
    $region9: #{sentiment_forward.1} parent=1 // pred_fallthru
      _
    // Predicated region
    $region10: #{sentiment_forward.1} parent=1 // pred_check
      _
    $region11: #{sentiment_forward.1} parent=1 // pred_check_branch
      %18 = sbr.rel (0) target = $region13
    $region12: #{sentiment_forward.1} parent=1 // pred_region
      %s20 = ssub.s32 2048, 2048
      %21 = vsyncadd [#allocation4], %s20
      %s22 = sshll.u32 [#allocation3], 4
      %s23 = int_to_ptr.vmem [resolvable:$true] %s22
      %28 = dma.hbm_to_vmem [thread:$0]  %s2, 2048, %s23, [#allocation4], 256, 256, 16
    $region13: #{sentiment_forward.1} parent=1 // pred_fallthru
      _
    // Predicated region
    $region14: #{sentiment_forward.1} parent=1 // pred_check
      _
    $region15: #{sentiment_forward.1} parent=1 // pred_check_branch
      %30 = sbr.rel (0) target = $region17
    $region16: #{sentiment_forward.1} parent=1 // pred_region
      _
    $region17: #{sentiment_forward.1} parent=1 // pred_fallthru
      _
    // Predicated region
    $region18: #{sentiment_forward.1} parent=1 // pred_check
      _
    $region19: #{sentiment_forward.1} parent=1 // pred_check_branch
      %32 = sbr.rel (0) target = $region21
    $region20: #{sentiment_forward.1} parent=1 // pred_region
      %s34 = ssub.s32 1024, 1024
      %35 = vsyncadd [#allocation6], %s34
      %s36 = sshll.u32 [#allocation5], 4
      %s37 = int_to_ptr.vmem [resolvable:$true] %s36
      %42 = dma.hbm_to_vmem [thread:$0]  %s4, 1024, %s37, [#allocation6], 128, 128, 8
    $region21: #{sentiment_forward.1} parent=1 // pred_fallthru
      _
    // Predicated region
    $region22: #{sentiment_forward.1} parent=1 // pred_check
      _
    $region23: #{sentiment_forward.1} parent=1 // pred_check_branch
      %44 = sbr.rel (0) target = $region25
    $region24: #{sentiment_forward.1} parent=1 // pred_region
      _
    $region25: #{sentiment_forward.1} parent=1 // pred_fallthru
      _
    // Predicated region
    $region26: #{sentiment_forward.1} parent=1 // pred_check
      _
    $region27: #{sentiment_forward.1} parent=1 // pred_check_branch
      %46 = sbr.rel (0) target = $region29
    $region28: #{sentiment_forward.1} parent=1 // pred_region
      %47 = dma.done [#allocation4], 2048
    $region29: #{sentiment_forward.1} parent=1 // pred_fallthru
      _
    // Predicated region
    $region30: #{sentiment_forward.1} parent=1 // pred_check
      _
    $region31: #{sentiment_forward.1} parent=1 // pred_check_branch
      %49 = sbr.rel (0) target = $region33
    $region32: #{sentiment_forward.1} parent=1 // pred_region
      %50 = dma.done [#allocation6], 1024
    $region33: #{sentiment_forward.1} parent=1 // pred_fallthru
      _
    %v51 = vld [vmem:[%s0] sm:$0xff]
    %v52 = vld [vmem:[%s0 + $0x8] sm:$0xff]
    %v53 = vld [vmem:[%s0 + $0x10] sm:$0xff]
    %v54 = vld [vmem:[%s0 + $0x18] sm:$0xff]
    %v55 = vld [vmem:[%s0 + $0x20] sm:$0xff]
    %v56 = vld [vmem:[%s0 + $0x28] sm:$0xff]
    %v57 = vld [vmem:[%s0 + $0x30] sm:$0xff]
    %v58 = vld [vmem:[%s0 + $0x38] sm:$0xff]
    %v59 = vlaneseq
    %v60 = vand.u32 %v59, 127
    %61 = vset.pattern.permute.xlu0 0
    %62 = vperm.xlu0 %61, %v51
    %v63 = vpop.permute.xlu0 %62
    %64 = vset.pattern.permute.xlu0 0
    %65 = vperm.xlu0 %64, %v52
    %v66 = vpop.permute.xlu0 %65
    %67 = vset.pattern.permute.xlu0 0
    %68 = vperm.xlu0 %67, %v53
    %v69 = vpop.permute.xlu0 %68
    %70 = vset.pattern.permute.xlu0 0
    %71 = vperm.xlu0 %70, %v54
    %v72 = vpop.permute.xlu0 %71
    %73 = vset.pattern.permute.xlu0 0
    %74 = vperm.xlu0 %73, %v55
    %v75 = vpop.permute.xlu0 %74
    %76 = vset.pattern.permute.xlu0 0
    %77 = vperm.xlu0 %76, %v56
    %v78 = vpop.permute.xlu0 %77
    %79 = vset.pattern.permute.xlu0 0
    %80 = vperm.xlu0 %79, %v57
    %v81 = vpop.permute.xlu0 %80
    %82 = vset.pattern.permute.xlu0 0
    %83 = vperm.xlu0 %82, %v58
    %v84 = vpop.permute.xlu0 %83
    %vm85 = vcmp.eq.s32.totalorder %v60, %v63
    %vm86 = vcmp.eq.s32.totalorder %v60, %v66
    %vm87 = vcmp.eq.s32.totalorder %v60, %v69
    %vm88 = vcmp.eq.s32.totalorder %v60, %v72
    %vm89 = vcmp.eq.s32.totalorder %v60, %v75
    %vm90 = vcmp.eq.s32.totalorder %v60, %v78
    %vm91 = vcmp.eq.s32.totalorder %v60, %v81
    %vm92 = vcmp.eq.s32.totalorder %v60, %v84
    %93 = vset.pattern.permute.xlu0 1
    %94 = vperm.xlu0 %93, %v51
    %v95 = vpop.permute.xlu0 %94
    %96 = vset.pattern.permute.xlu0 1
    %97 = vperm.xlu0 %96, %v52
    %v98 = vpop.permute.xlu0 %97
    %99 = vset.pattern.permute.xlu0 1
    %100 = vperm.xlu0 %99, %v53
    %v101 = vpop.permute.xlu0 %100
    %102 = vset.pattern.permute.xlu0 1
    %103 = vperm.xlu0 %102, %v54
    %v104 = vpop.permute.xlu0 %103
    %105 = vset.pattern.permute.xlu0 1
    %106 = vperm.xlu0 %105, %v55
    %v107 = vpop.permute.xlu0 %106
    %108 = vset.pattern.permute.xlu0 1
    %109 = vperm.xlu0 %108, %v56
    %v110 = vpop.permute.xlu0 %109
    %111 = vset.pattern.permute.xlu0 1
    %112 = vperm.xlu0 %111, %v57
    %v113 = vpop.permute.xlu0 %112
    %114 = vset.pattern.permute.xlu0 1
    %115 = vperm.xlu0 %114, %v58
    %v116 = vpop.permute.xlu0 %115
    %vm117 = vcmp.eq.s32.totalorder %v60, %v95
    %vm118 = vcmp.eq.s32.totalorder %v60, %v98
    %vm119 = vcmp.eq.s32.totalorder %v60, %v101
    %vm120 = vcmp.eq.s32.totalorder %v60, %v104
    %vm121 = vcmp.eq.s32.totalorder %v60, %v107
    %vm122 = vcmp.eq.s32.totalorder %v60, %v110
    %vm123 = vcmp.eq.s32.totalorder %v60, %v113
    %vm124 = vcmp.eq.s32.totalorder %v60, %v116
    %vm125 = vmor %vm85, %vm117
    %vm126 = vmor %vm86, %vm118
    %vm127 = vmor %vm87, %vm119
    %vm128 = vmor %vm88, %vm120
    %vm129 = vmor %vm89, %vm121
    %vm130 = vmor %vm90, %vm122
    %vm131 = vmor %vm91, %vm123
    %vm132 = vmor %vm92, %vm124
    %133 = vset.pattern.permute.xlu0 2
    %134 = vperm.xlu0 %133, %v51
    %v135 = vpop.permute.xlu0 %134
    %136 = vset.pattern.permute.xlu0 2
    %137 = vperm.xlu0 %136, %v52
    %v138 = vpop.permute.xlu0 %137
    %139 = vset.pattern.permute.xlu0 2
    %140 = vperm.xlu0 %139, %v53
    %v141 = vpop.permute.xlu0 %140
    %142 = vset.pattern.permute.xlu0 2
    %143 = vperm.xlu0 %142, %v54
    %v144 = vpop.permute.xlu0 %143
    %145 = vset.pattern.permute.xlu0 2
    %146 = vperm.xlu0 %145, %v55
    %v147 = vpop.permute.xlu0 %146
    %148 = vset.pattern.permute.xlu0 2
    %149 = vperm.xlu0 %148, %v56
    %v150 = vpop.permute.xlu0 %149
    %151 = vset.pattern.permute.xlu0 2
    %152 = vperm.xlu0 %151, %v57
    %v153 = vpop.permute.xlu0 %152
    %154 = vset.pattern.permute.xlu0 2
    %155 = vperm.xlu0 %154, %v58
    %v156 = vpop.permute.xlu0 %155
    %vm157 = vcmp.eq.s32.totalorder %v60, %v135
    %vm158 = vcmp.eq.s32.totalorder %v60, %v138
    %vm159 = vcmp.eq.s32.totalorder %v60, %v141
    %vm160 = vcmp.eq.s32.totalorder %v60, %v144
    %vm161 = vcmp.eq.s32.totalorder %v60, %v147
    %vm162 = vcmp.eq.s32.totalorder %v60, %v150
    %vm163 = vcmp.eq.s32.totalorder %v60, %v153
    %vm164 = vcmp.eq.s32.totalorder %v60, %v156
    %vm165 = vmor %vm125, %vm157
    %vm166 = vmor %vm126, %vm158
    %vm167 = vmor %vm127, %vm159
    %vm168 = vmor %vm128, %vm160
    %vm169 = vmor %vm129, %vm161
    %vm170 = vmor %vm130, %vm162
    %vm171 = vmor %vm131, %vm163
    %vm172 = vmor %vm132, %vm164
    %173 = vset.pattern.permute.xlu0 3
    %174 = vperm.xlu0 %173, %v51
    %v175 = vpop.permute.xlu0 %174
    %176 = vset.pattern.permute.xlu0 3
    %177 = vperm.xlu0 %176, %v52
    %v178 = vpop.permute.xlu0 %177
    %179 = vset.pattern.permute.xlu0 3
    %180 = vperm.xlu0 %179, %v53
    %v181 = vpop.permute.xlu0 %180
    %182 = vset.pattern.permute.xlu0 3
    %183 = vperm.xlu0 %182, %v54
    %v184 = vpop.permute.xlu0 %183
    %185 = vset.pattern.permute.xlu0 3
    %186 = vperm.xlu0 %185, %v55
    %v187 = vpop.permute.xlu0 %186
    %188 = vset.pattern.permute.xlu0 3
    %189 = vperm.xlu0 %188, %v56
    %v190 = vpop.permute.xlu0 %189
    %191 = vset.pattern.permute.xlu0 3
    %192 = vperm.xlu0 %191, %v57
    %v193 = vpop.permute.xlu0 %192
    %194 = vset.pattern.permute.xlu0 3
    %195 = vperm.xlu0 %194, %v58
    %v196 = vpop.permute.xlu0 %195
    %vm197 = vcmp.eq.s32.totalorder %v60, %v175
    %vm198 = vcmp.eq.s32.totalorder %v60, %v178
    %vm199 = vcmp.eq.s32.totalorder %v60, %v181
    %vm200 = vcmp.eq.s32.totalorder %v60, %v184
    %vm201 = vcmp.eq.s32.totalorder %v60, %v187
    %vm202 = vcmp.eq.s32.totalorder %v60, %v190
    %vm203 = vcmp.eq.s32.totalorder %v60, %v193
    %vm204 = vcmp.eq.s32.totalorder %v60, %v196
    %vm205 = vmor %vm165, %vm197
    %vm206 = vmor %vm166, %vm198
    %vm207 = vmor %vm167, %vm199
    %vm208 = vmor %vm168, %vm200
    %vm209 = vmor %vm169, %vm201
    %vm210 = vmor %vm170, %vm202
    %vm211 = vmor %vm171, %vm203
    %vm212 = vmor %vm172, %vm204
    %v213 = vsel %vm205, 1.0, 0.0
    %v214 = vsel %vm206, 1.0, 0.0
    %v215 = vsel %vm207, 1.0, 0.0
    %v216 = vsel %vm208, 1.0, 0.0
    %v217 = vsel %vm209, 1.0, 0.0
    %v218 = vsel %vm210, 1.0, 0.0
    %v219 = vsel %vm211, 1.0, 0.0
    %v220 = vsel %vm212, 1.0, 0.0
    %v221 = vld [vmem:[%s1] sm:$0xff]
    %v222 = vld [vmem:[%s1 + $0x8] sm:$0xff]
    %v223 = vld [vmem:[%s1 + $0x10] sm:$0xff]
    %v224 = vld [vmem:[%s1 + $0x18] sm:$0xff]
    %v225 = vld [vmem:[%s1 + $0x20] sm:$0xff]
    %v226 = vld [vmem:[%s1 + $0x28] sm:$0xff]
    %v227 = vld [vmem:[%s1 + $0x30] sm:$0xff]
    %v228 = vld [vmem:[%s1 + $0x38] sm:$0xff]
    %v229 = vld [vmem:[%s1 + $0x40] sm:$0xff]
    %v230 = vld [vmem:[%s1 + $0x48] sm:$0xff]
    %v231 = vld [vmem:[%s1 + $0x50] sm:$0xff]
    %v232 = vld [vmem:[%s1 + $0x58] sm:$0xff]
    %v233 = vld [vmem:[%s1 + $0x60] sm:$0xff]
    %v234 = vld [vmem:[%s1 + $0x68] sm:$0xff]
    %v235 = vld [vmem:[%s1 + $0x70] sm:$0xff]
    %v236 = vld [vmem:[%s1 + $0x78] sm:$0xff]
    %v237 = vld [vmem:[%s1 + $0x80] sm:$0xff]
    %v238 = vld [vmem:[%s1 + $0x88] sm:$0xff]
    %v239 = vld [vmem:[%s1 + $0x90] sm:$0xff]
    %v240 = vld [vmem:[%s1 + $0x98] sm:$0xff]
    %v241 = vld [vmem:[%s1 + $0xa0] sm:$0xff]
    %v242 = vld [vmem:[%s1 + $0xa8] sm:$0xff]
    %v243 = vld [vmem:[%s1 + $0xb0] sm:$0xff]
    %v244 = vld [vmem:[%s1 + $0xb8] sm:$0xff]
    %v245 = vld [vmem:[%s1 + $0xc0] sm:$0xff]
    %v246 = vld [vmem:[%s1 + $0xc8] sm:$0xff]
    %v247 = vld [vmem:[%s1 + $0xd0] sm:$0xff]
    %v248 = vld [vmem:[%s1 + $0xd8] sm:$0xff]
    %v249 = vld [vmem:[%s1 + $0xe0] sm:$0xff]
    %v250 = vld [vmem:[%s1 + $0xe8] sm:$0xff]
    %v251 = vld [vmem:[%s3] sm:$0x3]
    %v253 = vlaneseq
    %v254 = vshrl.u32 %v253, 7
    %v255 = vsub.s32 0, %v254
    %v256 = vrot.slane %v251, %v255
    %v257 = vlaneseq
    %v258 = vshrl.u32 %v257, 7
    %v259 = vsub.s32 1, %v258
    %v260 = vrot.slane %v251, %v259
    %vm263 = vcmask 982016
    %v265 = vsel %vm263, %v213, 0
    %v268 = vsel %vm263, %v214, 0
    %v271 = vsel %vm263, %v215, 0
    %v274 = vsel %vm263, %v216, 0
    %v277 = vsel %vm263, %v217, 0
    %v280 = vsel %vm263, %v218, 0
    %v283 = vsel %vm263, %v219, 0
    %v286 = vsel %vm263, %v220, 0
    %288 = vmatprep.subr.mxu0 %v222
    %289 = vmatpush1.msra.mxu0 %v221
    %290 = vmatprep.subr.mxu0 %v224
    %291 = vmatpush1.msra.mxu0 %v223
    %292 = vmatprep.subr.mxu0 %v226
    %293 = vmatpush1.msra.mxu0 %v225
    %294 = vmatprep.subr.mxu0 %v228
    %295 = vmatpush1.msra.mxu0 %v227
    %296 = vmatprep.subr.mxu0 %v230
    %297 = vmatpush1.msra.mxu0 %v229
    %298 = vmatprep.subr.mxu0 %v232
    %299 = vmatpush1.msra.mxu0 %v231
    %300 = vmatprep.subr.mxu0 %v234
    %301 = vmatpush1.msra.mxu0 %v233
    %302 = vmatprep.subr.mxu0 %v236
    %303 = vmatpush1.msra.mxu0 %v235
    %304 = vmatprep.subr.mxu0 %v238
    %305 = vmatpush1.msra.mxu0 %v237
    %306 = vmatprep.subr.mxu0 %v240
    %307 = vmatpush1.msra.mxu0 %v239
    %308 = vmatprep.subr.mxu0 %v242
    %309 = vmatpush1.msra.mxu0 %v241
    %310 = vmatprep.subr.mxu0 %v244
    %311 = vmatpush1.msra.mxu0 %v243
    %312 = vmatprep.subr.mxu0 %v246
    %313 = vmatpush1.msra.mxu0 %v245
    %314 = vmatprep.subr.mxu0 %v248
    %315 = vmatpush1.msra.mxu0 %v247
    %316 = vmatprep.subr.mxu0 %v250
    %317 = vmatpush1.msra.mxu0 %v249
    %318 = vmatprep.subr.mxu0 0.0
    %319 = vmatpush1.msra.mxu0 0.0
    %320 = vmatprep.subr.mxu0 0.0
    %321 = vmatpush1.msra.mxu0 0.0
    %322 = vmatprep.subr.mxu0 0.0
    %323 = vmatpush1.msra.mxu0 0.0
    %324 = vmatprep.subr.mxu0 0.0
    %325 = vmatpush1.msra.mxu0 0.0
    %326 = vmatprep.subr.mxu0 0.0
    %327 = vmatpush1.msra.mxu0 0.0
    %328 = vmatprep.subr.mxu0 0.0
    %329 = vmatpush1.msra.mxu0 0.0
    %330 = vmatprep.subr.mxu0 0.0
    %331 = vmatpush1.msra.mxu0 0.0
    %332 = vmatprep.subr.mxu0 0.0
    %333 = vmatpush1.msra.mxu0 0.0
    %334 = vmatprep.subr.mxu0 0.0
    %335 = vmatpush1.msra.mxu0 0.0
    %336 = vmatprep.subr.mxu0 0.0
    %337 = vmatpush1.msra.mxu0 0.0
    %338 = vmatprep.subr.mxu0 0.0
    %339 = vmatpush1.msra.mxu0 0.0
    %340 = vmatprep.subr.mxu0 0.0
    %341 = vmatpush1.msra.mxu0 0.0
    %342 = vmatprep.subr.mxu0 0.0
    %343 = vmatpush1.msra.mxu0 0.0
    %344 = vmatprep.subr.mxu0 0.0
    %345 = vmatpush1.msra.mxu0 0.0
    %346 = vmatprep.subr.mxu0 0.0
    %347 = vmatpush1.msra.mxu0 0.0
    %348 = vmatprep.subr.mxu0 0.0
    %349 = vmatpush1.msra.mxu0 0.0
    %350 = vmatprep.subr.mxu0 0.0
    %351 = vmatpush1.msra.mxu0 0.0
    %352 = vmatprep.mubr.f32.mxu0 0.0
    %353 = vmatmul.mubr.f32.gmra.mrb[0].mxu0 %v265
    %v354 = vpop.f32.mrb[0].mxu0
    %v355 = vadd.f32 %v256, %v354
    %v356 = vpop.f32.mrb[0].mxu0
    %v357 = vadd.f32 %v260, %v356
    %358 = vmatprep.mubr.f32.mxu0 0.0
    %359 = vmatmul.mubr.f32.gmra.mrb[0].mxu0 %v268
    %v360 = vpop.f32.mrb[0].mxu0
    %v361 = vadd.f32 %v256, %v360
    %v362 = vpop.f32.mrb[0].mxu0
    %v363 = vadd.f32 %v260, %v362
    %364 = vmatprep.mubr.f32.mxu0 0.0
    %365 = vmatmul.mubr.f32.gmra.mrb[0].mxu0 %v271
    %v366 = vpop.f32.mrb[0].mxu0
    %v367 = vadd.f32 %v256, %v366
    %v368 = vpop.f32.mrb[0].mxu0
    %v369 = vadd.f32 %v260, %v368
    %370 = vmatprep.mubr.f32.mxu0 0.0
    %371 = vmatmul.mubr.f32.gmra.mrb[0].mxu0 %v274
    %v372 = vpop.f32.mrb[0].mxu0
    %v373 = vadd.f32 %v256, %v372
    %v374 = vpop.f32.mrb[0].mxu0
    %v375 = vadd.f32 %v260, %v374
    %376 = vmatprep.mubr.f32.mxu0 0.0
    %377 = vmatmul.mubr.f32.gmra.mrb[0].mxu0 %v277
    %v378 = vpop.f32.mrb[0].mxu0
    %v379 = vadd.f32 %v256, %v378
    %v380 = vpop.f32.mrb[0].mxu0
    %v381 = vadd.f32 %v260, %v380
    %382 = vmatprep.mubr.f32.mxu0 0.0
    %383 = vmatmul.mubr.f32.gmra.mrb[0].mxu0 %v280
    %v384 = vpop.f32.mrb[0].mxu0
    %v385 = vadd.f32 %v256, %v384
    %v386 = vpop.f32.mrb[0].mxu0
    %v387 = vadd.f32 %v260, %v386
    %388 = vmatprep.mubr.f32.mxu0 0.0
    %389 = vmatmul.mubr.f32.gmra.mrb[0].mxu0 %v283
    %v390 = vpop.f32.mrb[0].mxu0
    %v391 = vadd.f32 %v256, %v390
    %v392 = vpop.f32.mrb[0].mxu0
    %v393 = vadd.f32 %v260, %v392
    %394 = vmatprep.mubr.f32.mxu0 0.0
    %395 = vmatmul.mubr.f32.gmra.mrb[0].mxu0 %v286
    %v396 = vpop.f32.mrb[0].mxu0
    %v397 = vadd.f32 %v256, %v396
    %v398 = vpop.f32.mrb[0].mxu0
    %v399 = vadd.f32 %v260, %v398
    %400 = vdwg.mxu0
    %401 = vst [vmem:[#allocation2] sm:$0xff] %v355
    %402 = vst [vmem:[#allocation2 + $0x8] sm:$0xff] %v357
    %403 = vst [vmem:[#allocation2 + $0x10] sm:$0xff] %v361
    %404 = vst [vmem:[#allocation2 + $0x18] sm:$0xff] %v363
    %405 = vst [vmem:[#allocation2 + $0x20] sm:$0xff] %v367
    %406 = vst [vmem:[#allocation2 + $0x28] sm:$0xff] %v369
    %407 = vst [vmem:[#allocation2 + $0x30] sm:$0xff] %v373
    %408 = vst [vmem:[#allocation2 + $0x38] sm:$0xff] %v375
    %409 = vst [vmem:[#allocation2 + $0x40] sm:$0xff] %v379
    %410 = vst [vmem:[#allocation2 + $0x48] sm:$0xff] %v381
    %411 = vst [vmem:[#allocation2 + $0x50] sm:$0xff] %v385
    %412 = vst [vmem:[#allocation2 + $0x58] sm:$0xff] %v387
    %413 = vst [vmem:[#allocation2 + $0x60] sm:$0xff] %v391
    %414 = vst [vmem:[#allocation2 + $0x68] sm:$0xff] %v393
    %415 = vst [vmem:[#allocation2 + $0x70] sm:$0xff] %v397
    %416 = vst [vmem:[#allocation2 + $0x78] sm:$0xff] %v399
    %v417 = vld [vmem:[#allocation2] sm:$0xff]
    %v418 = vld [vmem:[#allocation2 + $0x8] sm:$0xff]
    %v419 = vld [vmem:[#allocation3] sm:$0xff]
    %v420 = vld [vmem:[#allocation3 + $0x8] sm:$0xff]
    %v421 = vld [vmem:[#allocation3 + $0x10] sm:$0xff]
    %v422 = vld [vmem:[#allocation3 + $0x18] sm:$0xff]
    %v423 = vld [vmem:[#allocation3 + $0x20] sm:$0xff]
    %v424 = vld [vmem:[#allocation3 + $0x28] sm:$0xff]
    %v425 = vld [vmem:[#allocation3 + $0x30] sm:$0xff]
    %v426 = vld [vmem:[#allocation3 + $0x38] sm:$0xff]
    %v427 = vld [vmem:[#allocation3 + $0x40] sm:$0xff]
    %v428 = vld [vmem:[#allocation3 + $0x48] sm:$0xff]
    %v429 = vld [vmem:[#allocation3 + $0x50] sm:$0xff]
    %v430 = vld [vmem:[#allocation3 + $0x58] sm:$0xff]
    %v431 = vld [vmem:[#allocation3 + $0x60] sm:$0xff]
    %v432 = vld [vmem:[#allocation3 + $0x68] sm:$0xff]
    %v433 = vld [vmem:[#allocation3 + $0x70] sm:$0xff]
    %v434 = vld [vmem:[#allocation3 + $0x78] sm:$0xff]
    %vm435 = vcmask 523264
    %v437 = vsel %vm435, 0.0, 0
    %439 = vmatprep.subr.mxu0 %v420
    %440 = vmatpush1.msra.mxu0 %v419
    %441 = vmatprep.subr.mxu0 %v422
    %442 = vmatpush1.msra.mxu0 %v421
    %443 = vmatprep.subr.mxu0 %v424
    %444 = vmatpush1.msra.mxu0 %v423
    %445 = vmatprep.subr.mxu0 %v426
    %446 = vmatpush1.msra.mxu0 %v425
    %447 = vmatprep.subr.mxu0 %v428
    %448 = vmatpush1.msra.mxu0 %v427
    %449 = vmatprep.subr.mxu0 %v430
    %450 = vmatpush1.msra.mxu0 %v429
    %451 = vmatprep.subr.mxu0 %v432
    %452 = vmatpush1.msra.mxu0 %v431
    %453 = vmatprep.subr.mxu0 %v434
    %454 = vmatpush1.msra.mxu0 %v433
    %455 = vmatprep.subr.mxu0 0.0
    %456 = vmatpush1.msra.mxu0 0.0
    %457 = vmatprep.subr.mxu0 0.0
    %458 = vmatpush1.msra.mxu0 0.0
    %459 = vmatprep.subr.mxu0 0.0
    %460 = vmatpush1.msra.mxu0 0.0
    %461 = vmatprep.subr.mxu0 0.0
    %462 = vmatpush1.msra.mxu0 0.0
    %463 = vmatprep.subr.mxu0 0.0
    %464 = vmatpush1.msra.mxu0 0.0
    %465 = vmatprep.subr.mxu0 0.0
    %466 = vmatpush1.msra.mxu0 0.0
    %467 = vmatprep.subr.mxu0 0.0
    %468 = vmatpush1.msra.mxu0 0.0
    %469 = vmatprep.subr.mxu0 0.0
    %470 = vmatpush1.msra.mxu0 0.0
    %471 = vmatprep.subr.mxu0 0.0
    %472 = vmatpush1.msra.mxu0 0.0
    %473 = vmatprep.subr.mxu0 0.0
    %474 = vmatpush1.msra.mxu0 0.0
    %475 = vmatprep.subr.mxu0 0.0
    %476 = vmatpush1.msra.mxu0 0.0
    %477 = vmatprep.subr.mxu0 0.0
    %478 = vmatpush1.msra.mxu0 0.0
    %479 = vmatprep.subr.mxu0 0.0
    %480 = vmatpush1.msra.mxu0 0.0
    %481 = vmatprep.subr.mxu0 0.0
    %482 = vmatpush1.msra.mxu0 0.0
    %483 = vmatprep.subr.mxu0 0.0
    %484 = vmatpush1.msra.mxu0 0.0
    %485 = vmatprep.subr.mxu0 0.0
    %486 = vmatpush1.msra.mxu0 0.0
    %487 = vmatprep.subr.mxu0 0.0
    %488 = vmatpush1.msra.mxu0 0.0
    %489 = vmatprep.subr.mxu0 0.0
    %490 = vmatpush1.msra.mxu0 0.0
    %491 = vmatprep.subr.mxu0 0.0
    %492 = vmatpush1.msra.mxu0 0.0
    %493 = vmatprep.subr.mxu0 0.0
    %494 = vmatpush1.msra.mxu0 0.0
    %495 = vmatprep.subr.mxu0 0.0
    %496 = vmatpush1.msra.mxu0 0.0
    %497 = vmatprep.subr.mxu0 0.0
    %498 = vmatpush1.msra.mxu0 0.0
    %499 = vmatprep.subr.mxu0 0.0
    %500 = vmatpush1.msra.mxu0 0.0
    %501 = vmatprep.subr.mxu0 0.0
    %502 = vmatpush1.msra.mxu0 0.0
    %503 = vmatprep.mubr.f32.mxu0 0.0
    %504 = vmatmul.mubr.f32.gmra.mrb[0].mxu0 %v437
    %v505 = vpop.f32.mrb[0].mxu0
    %v506 = vadd.f32 0.0, %v505
    %v507 = vpop.f32.mrb[0].mxu0
    %v508 = vadd.f32 0.0, %v507
    %509 = vdwg.mxu0
    %v510 = vadd.f32 %v417, %v506
    %v511 = vadd.f32 %v418, %v508
    %v512 = vmul.f32 %v510, 0.5
    %v513 = vmul.f32 %v511, 0.5
    %v514 = vtanh.pop %v512
    %v515 = vtanh.pop %v513
    %v516 = vmul.f32 %v514, 0.5
    %v517 = vmul.f32 %v515, 0.5
    %v518 = vadd.f32 %v516, 0.5
    %v519 = vadd.f32 %v517, 0.5
    %v520 = vtanh.pop %v511
    %v521 = vmul.f32 %v518, 0.0
    %523 = vrot.lane.b32.xlu0 %v520, 64
    %v524 = vpop.permute.xlu0 %523
    %v526 = vmul.f32 %v518, %v524
    %528 = vrot.lane.b32.xlu0 %v526, 64
    %v529 = vpop.permute.xlu0 %528
    %v531 = vadd.f32 %v521, %v529
    %v532 = vtanh.pop %v531
    %534 = vrot.lane.b32.xlu0 %v532, 64
    %v535 = vpop.permute.xlu0 %534
    %v537 = vmul.f32 %v519, %v535
    %v538 = vld [vmem:[#allocation2 + $0x10] sm:$0xff]
    %v539 = vld [vmem:[#allocation2 + $0x18] sm:$0xff]
    %v541 = vsel %vm435, %v537, 0
    %543 = vmatprep.subr.mxu0 %v420
    %544 = vmatpush1.msra.mxu0 %v419
    %545 = vmatprep.subr.mxu0 %v422
    %546 = vmatpush1.msra.mxu0 %v421
    %547 = vmatprep.subr.mxu0 %v424
    %548 = vmatpush1.msra.mxu0 %v423
    %549 = vmatprep.subr.mxu0 %v426
    %550 = vmatpush1.msra.mxu0 %v425
    %551 = vmatprep.subr.mxu0 %v428
    %552 = vmatpush1.msra.mxu0 %v427
    %553 = vmatprep.subr.mxu0 %v430
    %554 = vmatpush1.msra.mxu0 %v429
    %555 = vmatprep.subr.mxu0 %v432
    %556 = vmatpush1.msra.mxu0 %v431
    %557 = vmatprep.subr.mxu0 %v434
    %558 = vmatpush1.msra.mxu0 %v433
    %559 = vmatprep.subr.mxu0 0.0
    %560 = vmatpush1.msra.mxu0 0.0
    %561 = vmatprep.subr.mxu0 0.0
    %562 = vmatpush1.msra.mxu0 0.0
    %563 = vmatprep.subr.mxu0 0.0
    %564 = vmatpush1.msra.mxu0 0.0
    %565 = vmatprep.subr.mxu0 0.0
    %566 = vmatpush1.msra.mxu0 0.0
    %567 = vmatprep.subr.mxu0 0.0
    %568 = vmatpush1.msra.mxu0 0.0
    %569 = vmatprep.subr.mxu0 0.0
    %570 = vmatpush1.msra.mxu0 0.0
    %571 = vmatprep.subr.mxu0 0.0
    %572 = vmatpush1.msra.mxu0 0.0
    %573 = vmatprep.subr.mxu0 0.0
    %574 = vmatpush1.msra.mxu0 0.0
    %575 = vmatprep.subr.mxu0 0.0
    %576 = vmatpush1.msra.mxu0 0.0
    %577 = vmatprep.subr.mxu0 0.0
    %578 = vmatpush1.msra.mxu0 0.0
    %579 = vmatprep.subr.mxu0 0.0
    %580 = vmatpush1.msra.mxu0 0.0
    %581 = vmatprep.subr.mxu0 0.0
    %582 = vmatpush1.msra.mxu0 0.0
    %583 = vmatprep.subr.mxu0 0.0
    %584 = vmatpush1.msra.mxu0 0.0
    %585 = vmatprep.subr.mxu0 0.0
    %586 = vmatpush1.msra.mxu0 0.0
    %587 = vmatprep.subr.mxu0 0.0
    %588 = vmatpush1.msra.mxu0 0.0
    %589 = vmatprep.subr.mxu0 0.0
    %590 = vmatpush1.msra.mxu0 0.0
    %591 = vmatprep.subr.mxu0 0.0
    %592 = vmatpush1.msra.mxu0 0.0
    %593 = vmatprep.subr.mxu0 0.0
    %594 = vmatpush1.msra.mxu0 0.0
    %595 = vmatprep.subr.mxu0 0.0
    %596 = vmatpush1.msra.mxu0 0.0
    %597 = vmatprep.subr.mxu0 0.0
    %598 = vmatpush1.msra.mxu0 0.0
    %599 = vmatprep.subr.mxu0 0.0
    %600 = vmatpush1.msra.mxu0 0.0
    %601 = vmatprep.subr.mxu0 0.0
    %602 = vmatpush1.msra.mxu0 0.0
    %603 = vmatprep.subr.mxu0 0.0
    %604 = vmatpush1.msra.mxu0 0.0
    %605 = vmatprep.subr.mxu0 0.0
    %606 = vmatpush1.msra.mxu0 0.0
    %607 = vmatprep.mubr.f32.mxu0 0.0
    %608 = vmatmul.mubr.f32.gmra.mrb[0].mxu0 %v541
    %v609 = vpop.f32.mrb[0].mxu0
    %v610 = vadd.f32 0.0, %v609
    %v611 = vpop.f32.mrb[0].mxu0
    %v612 = vadd.f32 0.0, %v611
    %613 = vdwg.mxu0
    %v614 = vadd.f32 %v538, %v610
    %v615 = vadd.f32 %v539, %v612
    %v616 = vmul.f32 %v614, 0.5
    %v617 = vmul.f32 %v615, 0.5
    %v618 = vtanh.pop %v616
    %v619 = vtanh.pop %v617
    %v620 = vmul.f32 %v618, 0.5
    %v621 = vmul.f32 %v619, 0.5
    %v622 = vadd.f32 %v620, 0.5
    %v623 = vadd.f32 %v621, 0.5
    %v624 = vtanh.pop %v615
    %v625 = vmul.f32 %v622, %v531
    %627 = vrot.lane.b32.xlu0 %v624, 64
    %v628 = vpop.permute.xlu0 %627
    %v630 = vmul.f32 %v622, %v628
    %632 = vrot.lane.b32.xlu0 %v630, 64
    %v633 = vpop.permute.xlu0 %632
    %v635 = vadd.f32 %v625, %v633
    %v636 = vtanh.pop %v635
    %638 = vrot.lane.b32.xlu0 %v636, 64
    %v639 = vpop.permute.xlu0 %638
    %v641 = vmul.f32 %v623, %v639
    %v642 = vld [vmem:[#allocation2 + $0x20] sm:$0xff]
    %v643 = vld [vmem:[#allocation2 + $0x28] sm:$0xff]
    %v645 = vsel %vm435, %v641, 0
    %647 = vmatprep.subr.mxu0 %v420
    %648 = vmatpush1.msra.mxu0 %v419
    %649 = vmatprep.subr.mxu0 %v422
    %650 = vmatpush1.msra.mxu0 %v421
    %651 = vmatprep.subr.mxu0 %v424
    %652 = vmatpush1.msra.mxu0 %v423
    %653 = vmatprep.subr.mxu0 %v426
    %654 = vmatpush1.msra.mxu0 %v425
    %655 = vmatprep.subr.mxu0 %v428
    %656 = vmatpush1.msra.mxu0 %v427
    %657 = vmatprep.subr.mxu0 %v430
    %658 = vmatpush1.msra.mxu0 %v429
    %659 = vmatprep.subr.mxu0 %v432
    %660 = vmatpush1.msra.mxu0 %v431
    %661 = vmatprep.subr.mxu0 %v434
    %662 = vmatpush1.msra.mxu0 %v433
    %663 = vmatprep.subr.mxu0 0.0
    %664 = vmatpush1.msra.mxu0 0.0
    %665 = vmatprep.subr.mxu0 0.0
    %666 = vmatpush1.msra.mxu0 0.0
    %667 = vmatprep.subr.mxu0 0.0
    %668 = vmatpush1.msra.mxu0 0.0
    %669 = vmatprep.subr.mxu0 0.0
    %670 = vmatpush1.msra.mxu0 0.0
    %671 = vmatprep.subr.mxu0 0.0
    %672 = vmatpush1.msra.mxu0 0.0
    %673 = vmatprep.subr.mxu0 0.0
    %674 = vmatpush1.msra.mxu0 0.0
    %675 = vmatprep.subr.mxu0 0.0
    %676 = vmatpush1.msra.mxu0 0.0
    %677 = vmatprep.subr.mxu0 0.0
    %678 = vmatpush1.msra.mxu0 0.0
    %679 = vmatprep.subr.mxu0 0.0
    %680 = vmatpush1.msra.mxu0 0.0
    %681 = vmatprep.subr.mxu0 0.0
    %682 = vmatpush1.msra.mxu0 0.0
    %683 = vmatprep.subr.mxu0 0.0
    %684 = vmatpush1.msra.mxu0 0.0
    %685 = vmatprep.subr.mxu0 0.0
    %686 = vmatpush1.msra.mxu0 0.0
    %687 = vmatprep.subr.mxu0 0.0
    %688 = vmatpush1.msra.mxu0 0.0
    %689 = vmatprep.subr.mxu0 0.0
    %690 = vmatpush1.msra.mxu0 0.0
    %691 = vmatprep.subr.mxu0 0.0
    %692 = vmatpush1.msra.mxu0 0.0
    %693 = vmatprep.subr.mxu0 0.0
    %694 = vmatpush1.msra.mxu0 0.0
    %695 = vmatprep.subr.mxu0 0.0
    %696 = vmatpush1.msra.mxu0 0.0
    %697 = vmatprep.subr.mxu0 0.0
    %698 = vmatpush1.msra.mxu0 0.0
    %699 = vmatprep.subr.mxu0 0.0
    %700 = vmatpush1.msra.mxu0 0.0
    %701 = vmatprep.subr.mxu0 0.0
    %702 = vmatpush1.msra.mxu0 0.0
    %703 = vmatprep.subr.mxu0 0.0
    %704 = vmatpush1.msra.mxu0 0.0
    %705 = vmatprep.subr.mxu0 0.0
    %706 = vmatpush1.msra.mxu0 0.0
    %707 = vmatprep.subr.mxu0 0.0
    %708 = vmatpush1.msra.mxu0 0.0
    %709 = vmatprep.subr.mxu0 0.0
    %710 = vmatpush1.msra.mxu0 0.0
    %711 = vmatprep.mubr.f32.mxu0 0.0
    %712 = vmatmul.mubr.f32.gmra.mrb[0].mxu0 %v645
    %v713 = vpop.f32.mrb[0].mxu0
    %v714 = vadd.f32 0.0, %v713
    %v715 = vpop.f32.mrb[0].mxu0
    %v716 = vadd.f32 0.0, %v715
    %717 = vdwg.mxu0
    %v718 = vadd.f32 %v642, %v714
    %v719 = vadd.f32 %v643, %v716
    %v720 = vmul.f32 %v718, 0.5
    %v721 = vmul.f32 %v719, 0.5
    %v722 = vtanh.pop %v720
    %v723 = vtanh.pop %v721
    %v724 = vmul.f32 %v722, 0.5
    %v725 = vmul.f32 %v723, 0.5
    %v726 = vadd.f32 %v724, 0.5
    %v727 = vadd.f32 %v725, 0.5
    %v728 = vtanh.pop %v719
    %v729 = vmul.f32 %v726, %v635
    %731 = vrot.lane.b32.xlu0 %v728, 64
    %v732 = vpop.permute.xlu0 %731
    %v734 = vmul.f32 %v726, %v732
    %736 = vrot.lane.b32.xlu0 %v734, 64
    %v737 = vpop.permute.xlu0 %736
    %v739 = vadd.f32 %v729, %v737
    %v740 = vtanh.pop %v739
    %742 = vrot.lane.b32.xlu0 %v740, 64
    %v743 = vpop.permute.xlu0 %742
    %v745 = vmul.f32 %v727, %v743
    %v746 = vld [vmem:[#allocation2 + $0x30] sm:$0xff]
    %v747 = vld [vmem:[#allocation2 + $0x38] sm:$0xff]
    %v749 = vsel %vm435, %v745, 0
    %751 = vmatprep.subr.mxu0 %v420
    %752 = vmatpush1.msra.mxu0 %v419
    %753 = vmatprep.subr.mxu0 %v422
    %754 = vmatpush1.msra.mxu0 %v421
    %755 = vmatprep.subr.mxu0 %v424
    %756 = vmatpush1.msra.mxu0 %v423
    %757 = vmatprep.subr.mxu0 %v426
    %758 = vmatpush1.msra.mxu0 %v425
    %759 = vmatprep.subr.mxu0 %v428
    %760 = vmatpush1.msra.mxu0 %v427
    %761 = vmatprep.subr.mxu0 %v430
    %762 = vmatpush1.msra.mxu0 %v429
    %763 = vmatprep.subr.mxu0 %v432
    %764 = vmatpush1.msra.mxu0 %v431
    %765 = vmatprep.subr.mxu0 %v434
    %766 = vmatpush1.msra.mxu0 %v433
    %767 = vmatprep.subr.mxu0 0.0
    %768 = vmatpush1.msra.mxu0 0.0
    %769 = vmatprep.subr.mxu0 0.0
    %770 = vmatpush1.msra.mxu0 0.0
    %771 = vmatprep.subr.mxu0 0.0
    %772 = vmatpush1.msra.mxu0 0.0
    %773 = vmatprep.subr.mxu0 0.0
    %774 = vmatpush1.msra.mxu0 0.0
    %775 = vmatprep.subr.mxu0 0.0
    %776 = vmatpush1.msra.mxu0 0.0
    %777 = vmatprep.subr.mxu0 0.0
    %778 = vmatpush1.msra.mxu0 0.0
    %779 = vmatprep.subr.mxu0 0.0
    %780 = vmatpush1.msra.mxu0 0.0
    %781 = vmatprep.subr.mxu0 0.0
    %782 = vmatpush1.msra.mxu0 0.0
    %783 = vmatprep.subr.mxu0 0.0
    %784 = vmatpush1.msra.mxu0 0.0
    %785 = vmatprep.subr.mxu0 0.0
    %786 = vmatpush1.msra.mxu0 0.0
    %787 = vmatprep.subr.mxu0 0.0
    %788 = vmatpush1.msra.mxu0 0.0
    %789 = vmatprep.subr.mxu0 0.0
    %790 = vmatpush1.msra.mxu0 0.0
    %791 = vmatprep.subr.mxu0 0.0
    %792 = vmatpush1.msra.mxu0 0.0
    %793 = vmatprep.subr.mxu0 0.0
    %794 = vmatpush1.msra.mxu0 0.0
    %795 = vmatprep.subr.mxu0 0.0
    %796 = vmatpush1.msra.mxu0 0.0
    %797 = vmatprep.subr.mxu0 0.0
    %798 = vmatpush1.msra.mxu0 0.0
    %799 = vmatprep.subr.mxu0 0.0
    %800 = vmatpush1.msra.mxu0 0.0
    %801 = vmatprep.subr.mxu0 0.0
    %802 = vmatpush1.msra.mxu0 0.0
    %803 = vmatprep.subr.mxu0 0.0
    %804 = vmatpush1.msra.mxu0 0.0
    %805 = vmatprep.subr.mxu0 0.0
    %806 = vmatpush1.msra.mxu0 0.0
    %807 = vmatprep.subr.mxu0 0.0
    %808 = vmatpush1.msra.mxu0 0.0
    %809 = vmatprep.subr.mxu0 0.0
    %810 = vmatpush1.msra.mxu0 0.0
    %811 = vmatprep.subr.mxu0 0.0
    %812 = vmatpush1.msra.mxu0 0.0
    %813 = vmatprep.subr.mxu0 0.0
    %814 = vmatpush1.msra.mxu0 0.0
    %815 = vmatprep.mubr.f32.mxu0 0.0
    %816 = vmatmul.mubr.f32.gmra.mrb[0].mxu0 %v749
    %v817 = vpop.f32.mrb[0].mxu0
    %v818 = vadd.f32 0.0, %v817
    %v819 = vpop.f32.mrb[0].mxu0
    %v820 = vadd.f32 0.0, %v819
    %821 = vdwg.mxu0
    %v822 = vadd.f32 %v746, %v818
    %v823 = vadd.f32 %v747, %v820
    %v824 = vmul.f32 %v822, 0.5
    %v825 = vmul.f32 %v823, 0.5
    %v826 = vtanh.pop %v824
    %v827 = vtanh.pop %v825
    %v828 = vmul.f32 %v826, 0.5
    %v829 = vmul.f32 %v827, 0.5
    %v830 = vadd.f32 %v828, 0.5
    %v831 = vadd.f32 %v829, 0.5
    %v832 = vtanh.pop %v823
    %v833 = vmul.f32 %v830, %v739
    %835 = vrot.lane.b32.xlu0 %v832, 64
    %v836 = vpop.permute.xlu0 %835
    %v838 = vmul.f32 %v830, %v836
    %840 = vrot.lane.b32.xlu0 %v838, 64
    %v841 = vpop.permute.xlu0 %840
    %v843 = vadd.f32 %v833, %v841
    %v844 = vtanh.pop %v843
    %846 = vrot.lane.b32.xlu0 %v844, 64
    %v847 = vpop.permute.xlu0 %846
    %v849 = vmul.f32 %v831, %v847
    %v850 = vld [vmem:[#allocation2 + $0x40] sm:$0xff]
    %v851 = vld [vmem:[#allocation2 + $0x48] sm:$0xff]
    %v853 = vsel %vm435, %v849, 0
    %855 = vmatprep.subr.mxu0 %v420
    %856 = vmatpush1.msra.mxu0 %v419
    %857 = vmatprep.subr.mxu0 %v422
    %858 = vmatpush1.msra.mxu0 %v421
    %859 = vmatprep.subr.mxu0 %v424
    %860 = vmatpush1.msra.mxu0 %v423
    %861 = vmatprep.subr.mxu0 %v426
    %862 = vmatpush1.msra.mxu0 %v425
    %863 = vmatprep.subr.mxu0 %v428
    %864 = vmatpush1.msra.mxu0 %v427
    %865 = vmatprep.subr.mxu0 %v430
    %866 = vmatpush1.msra.mxu0 %v429
    %867 = vmatprep.subr.mxu0 %v432
    %868 = vmatpush1.msra.mxu0 %v431
    %869 = vmatprep.subr.mxu0 %v434
    %870 = vmatpush1.msra.mxu0 %v433
    %871 = vmatprep.subr.mxu0 0.0
    %872 = vmatpush1.msra.mxu0 0.0
    %873 = vmatprep.subr.mxu0 0.0
    %874 = vmatpush1.msra.mxu0 0.0
    %875 = vmatprep.subr.mxu0 0.0
    %876 = vmatpush1.msra.mxu0 0.0
    %877 = vmatprep.subr.mxu0 0.0
    %878 = vmatpush1.msra.mxu0 0.0
    %879 = vmatprep.subr.mxu0 0.0
    %880 = vmatpush1.msra.mxu0 0.0
    %881 = vmatprep.subr.mxu0 0.0
    %882 = vmatpush1.msra.mxu0 0.0
    %883 = vmatprep.subr.mxu0 0.0
    %884 = vmatpush1.msra.mxu0 0.0
    %885 = vmatprep.subr.mxu0 0.0
    %886 = vmatpush1.msra.mxu0 0.0
    %887 = vmatprep.subr.mxu0 0.0
    %888 = vmatpush1.msra.mxu0 0.0
    %889 = vmatprep.subr.mxu0 0.0
    %890 = vmatpush1.msra.mxu0 0.0
    %891 = vmatprep.subr.mxu0 0.0
    %892 = vmatpush1.msra.mxu0 0.0
    %893 = vmatprep.subr.mxu0 0.0
    %894 = vmatpush1.msra.mxu0 0.0
    %895 = vmatprep.subr.mxu0 0.0
    %896 = vmatpush1.msra.mxu0 0.0
    %897 = vmatprep.subr.mxu0 0.0
    %898 = vmatpush1.msra.mxu0 0.0
    %899 = vmatprep.subr.mxu0 0.0
    %900 = vmatpush1.msra.mxu0 0.0
    %901 = vmatprep.subr.mxu0 0.0
    %902 = vmatpush1.msra.mxu0 0.0
    %903 = vmatprep.subr.mxu0 0.0
    %904 = vmatpush1.msra.mxu0 0.0
    %905 = vmatprep.subr.mxu0 0.0
    %906 = vmatpush1.msra.mxu0 0.0
    %907 = vmatprep.subr.mxu0 0.0
    %908 = vmatpush1.msra.mxu0 0.0
    %909 = vmatprep.subr.mxu0 0.0
    %910 = vmatpush1.msra.mxu0 0.0
    %911 = vmatprep.subr.mxu0 0.0
    %912 = vmatpush1.msra.mxu0 0.0
    %913 = vmatprep.subr.mxu0 0.0
    %914 = vmatpush1.msra.mxu0 0.0
    %915 = vmatprep.subr.mxu0 0.0
    %916 = vmatpush1.msra.mxu0 0.0
    %917 = vmatprep.subr.mxu0 0.0
    %918 = vmatpush1.msra.mxu0 0.0
    %919 = vmatprep.mubr.f32.mxu0 0.0
    %920 = vmatmul.mubr.f32.gmra.mrb[0].mxu0 %v853
    %v921 = vpop.f32.mrb[0].mxu0
    %v922 = vadd.f32 0.0, %v921
    %v923 = vpop.f32.mrb[0].mxu0
    %v924 = vadd.f32 0.0, %v923
    %925 = vdwg.mxu0
    %v926 = vadd.f32 %v850, %v922
    %v927 = vadd.f32 %v851, %v924
    %v928 = vmul.f32 %v926, 0.5
    %v929 = vmul.f32 %v927, 0.5
    %v930 = vtanh.pop %v928
    %v931 = vtanh.pop %v929
    %v932 = vmul.f32 %v930, 0.5
    %v933 = vmul.f32 %v931, 0.5
    %v934 = vadd.f32 %v932, 0.5
    %v935 = vadd.f32 %v933, 0.5
    %v936 = vtanh.pop %v927
    %v937 = vmul.f32 %v934, %v843
    %939 = vrot.lane.b32.xlu0 %v936, 64
    %v940 = vpop.permute.xlu0 %939
    %v942 = vmul.f32 %v934, %v940
    %944 = vrot.lane.b32.xlu0 %v942, 64
    %v945 = vpop.permute.xlu0 %944
    %v947 = vadd.f32 %v937, %v945
    %v948 = vtanh.pop %v947
    %950 = vrot.lane.b32.xlu0 %v948, 64
    %v951 = vpop.permute.xlu0 %950
    %v953 = vmul.f32 %v935, %v951
    %v954 = vld [vmem:[#allocation2 + $0x50] sm:$0xff]
    %v955 = vld [vmem:[#allocation2 + $0x58] sm:$0xff]
    %v957 = vsel %vm435, %v953, 0
    %959 = vmatprep.subr.mxu0 %v420
    %960 = vmatpush1.msra.mxu0 %v419
    %961 = vmatprep.subr.mxu0 %v422
    %962 = vmatpush1.msra.mxu0 %v421
    %963 = vmatprep.subr.mxu0 %v424
    %964 = vmatpush1.msra.mxu0 %v423
    %965 = vmatprep.subr.mxu0 %v426
    %966 = vmatpush1.msra.mxu0 %v425
    %967 = vmatprep.subr.mxu0 %v428
    %968 = vmatpush1.msra.mxu0 %v427
    %969 = vmatprep.subr.mxu0 %v430
    %970 = vmatpush1.msra.mxu0 %v429
    %971 = vmatprep.subr.mxu0 %v432
    %972 = vmatpush1.msra.mxu0 %v431
    %973 = vmatprep.subr.mxu0 %v434
    %974 = vmatpush1.msra.mxu0 %v433
    %975 = vmatprep.subr.mxu0 0.0
    %976 = vmatpush1.msra.mxu0 0.0
    %977 = vmatprep.subr.mxu0 0.0
    %978 = vmatpush1.msra.mxu0 0.0
    %979 = vmatprep.subr.mxu0 0.0
    %980 = vmatpush1.msra.mxu0 0.0
    %981 = vmatprep.subr.mxu0 0.0
    %982 = vmatpush1.msra.mxu0 0.0
    %983 = vmatprep.subr.mxu0 0.0
    %984 = vmatpush1.msra.mxu0 0.0
    %985 = vmatprep.subr.mxu0 0.0
    %986 = vmatpush1.msra.mxu0 0.0
    %987 = vmatprep.subr.mxu0 0.0
    %988 = vmatpush1.msra.mxu0 0.0
    %989 = vmatprep.subr.mxu0 0.0
    %990 = vmatpush1.msra.mxu0 0.0
    %991 = vmatprep.subr.mxu0 0.0
    %992 = vmatpush1.msra.mxu0 0.0
    %993 = vmatprep.subr.mxu0 0.0
    %994 = vmatpush1.msra.mxu0 0.0
    %995 = vmatprep.subr.mxu0 0.0
    %996 = vmatpush1.msra.mxu0 0.0
    %997 = vmatprep.subr.mxu0 0.0
    %998 = vmatpush1.msra.mxu0 0.0
    %999 = vmatprep.subr.mxu0 0.0
    %1000 = vmatpush1.msra.mxu0 0.0
    %1001 = vmatprep.subr.mxu0 0.0
    %1002 = vmatpush1.msra.mxu0 0.0
    %1003 = vmatprep.subr.mxu0 0.0
    %1004 = vmatpush1.msra.mxu0 0.0
    %1005 = vmatprep.subr.mxu0 0.0
    %1006 = vmatpush1.msra.mxu0 0.0
    %1007 = vmatprep.subr.mxu0 0.0
    %1008 = vmatpush1.msra.mxu0 0.0
    %1009 = vmatprep.subr.mxu0 0.0
    %1010 = vmatpush1.msra.mxu0 0.0
    %1011 = vmatprep.subr.mxu0 0.0
    %1012 = vmatpush1.msra.mxu0 0.0
    %1013 = vmatprep.subr.mxu0 0.0
    %1014 = vmatpush1.msra.mxu0 0.0
    %1015 = vmatprep.subr.mxu0 0.0
    %1016 = vmatpush1.msra.mxu0 0.0
    %1017 = vmatprep.subr.mxu0 0.0
    %1018 = vmatpush1.msra.mxu0 0.0
    %1019 = vmatprep.subr.mxu0 0.0
    %1020 = vmatpush1.msra.mxu0 0.0
    %1021 = vmatprep.subr.mxu0 0.0
    %1022 = vmatpush1.msra.mxu0 0.0
    %1023 = vmatprep.mubr.f32.mxu0 0.0
    %1024 = vmatmul.mubr.f32.gmra.mrb[0].mxu0 %v957
    %v1025 = vpop.f32.mrb[0].mxu0
    %v1026 = vadd.f32 0.0, %v1025
    %v1027 = vpop.f32.mrb[0].mxu0
    %v1028 = vadd.f32 0.0, %v1027
    %1029 = vdwg.mxu0
    %v1030 = vadd.f32 %v954, %v1026
    %v1031 = vadd.f32 %v955, %v1028
    %v1032 = vmul.f32 %v1030, 0.5
    %v1033 = vmul.f32 %v1031, 0.5
    %v1034 = vtanh.pop %v1032
    %v1035 = vtanh.pop %v1033
    %v1036 = vmul.f32 %v1034, 0.5
    %v1037 = vmul.f32 %v1035, 0.5
    %v1038 = vadd.f32 %v1036, 0.5
    %v1039 = vadd.f32 %v1037, 0.5
    %v1040 = vtanh.pop %v1031
    %v1041 = vmul.f32 %v1038, %v947
    %1043 = vrot.lane.b32.xlu0 %v1040, 64
    %v1044 = vpop.permute.xlu0 %1043
    %v1046 = vmul.f32 %v1038, %v1044
    %1048 = vrot.lane.b32.xlu0 %v1046, 64
    %v1049 = vpop.permute.xlu0 %1048
    %v1051 = vadd.f32 %v1041, %v1049
    %v1052 = vtanh.pop %v1051
    %1054 = vrot.lane.b32.xlu0 %v1052, 64
    %v1055 = vpop.permute.xlu0 %1054
    %v1057 = vmul.f32 %v1039, %v1055
    %v1058 = vld [vmem:[#allocation2 + $0x60] sm:$0xff]
    %v1059 = vld [vmem:[#allocation2 + $0x68] sm:$0xff]
    %v1061 = vsel %vm435, %v1057, 0
    %1063 = vmatprep.subr.mxu0 %v420
    %1064 = vmatpush1.msra.mxu0 %v419
    %1065 = vmatprep.subr.mxu0 %v422
    %1066 = vmatpush1.msra.mxu0 %v421
    %1067 = vmatprep.subr.mxu0 %v424
    %1068 = vmatpush1.msra.mxu0 %v423
    %1069 = vmatprep.subr.mxu0 %v426
    %1070 = vmatpush1.msra.mxu0 %v425
    %1071 = vmatprep.subr.mxu0 %v428
    %1072 = vmatpush1.msra.mxu0 %v427
    %1073 = vmatprep.subr.mxu0 %v430
    %1074 = vmatpush1.msra.mxu0 %v429
    %1075 = vmatprep.subr.mxu0 %v432
    %1076 = vmatpush1.msra.mxu0 %v431
    %1077 = vmatprep.subr.mxu0 %v434
    %1078 = vmatpush1.msra.mxu0 %v433
    %1079 = vmatprep.subr.mxu0 0.0
    %1080 = vmatpush1.msra.mxu0 0.0
    %1081 = vmatprep.subr.mxu0 0.0
    %1082 = vmatpush1.msra.mxu0 0.0
    %1083 = vmatprep.subr.mxu0 0.0
    %1084 = vmatpush1.msra.mxu0 0.0
    %1085 = vmatprep.subr.mxu0 0.0
    %1086 = vmatpush1.msra.mxu0 0.0
    %1087 = vmatprep.subr.mxu0 0.0
    %1088 = vmatpush1.msra.mxu0 0.0
    %1089 = vmatprep.subr.mxu0 0.0
    %1090 = vmatpush1.msra.mxu0 0.0
    %1091 = vmatprep.subr.mxu0 0.0
    %1092 = vmatpush1.msra.mxu0 0.0
    %1093 = vmatprep.subr.mxu0 0.0
    %1094 = vmatpush1.msra.mxu0 0.0
    %1095 = vmatprep.subr.mxu0 0.0
    %1096 = vmatpush1.msra.mxu0 0.0
    %1097 = vmatprep.subr.mxu0 0.0
    %1098 = vmatpush1.msra.mxu0 0.0
    %1099 = vmatprep.subr.mxu0 0.0
    %1100 = vmatpush1.msra.mxu0 0.0
    %1101 = vmatprep.subr.mxu0 0.0
    %1102 = vmatpush1.msra.mxu0 0.0
    %1103 = vmatprep.subr.mxu0 0.0
    %1104 = vmatpush1.msra.mxu0 0.0
    %1105 = vmatprep.subr.mxu0 0.0
    %1106 = vmatpush1.msra.mxu0 0.0
    %1107 = vmatprep.subr.mxu0 0.0
    %1108 = vmatpush1.msra.mxu0 0.0
    %1109 = vmatprep.subr.mxu0 0.0
    %1110 = vmatpush1.msra.mxu0 0.0
    %1111 = vmatprep.subr.mxu0 0.0
    %1112 = vmatpush1.msra.mxu0 0.0
    %1113 = vmatprep.subr.mxu0 0.0
    %1114 = vmatpush1.msra.mxu0 0.0
    %1115 = vmatprep.subr.mxu0 0.0
    %1116 = vmatpush1.msra.mxu0 0.0
    %1117 = vmatprep.subr.mxu0 0.0
    %1118 = vmatpush1.msra.mxu0 0.0
    %1119 = vmatprep.subr.mxu0 0.0
    %1120 = vmatpush1.msra.mxu0 0.0
    %1121 = vmatprep.subr.mxu0 0.0
    %1122 = vmatpush1.msra.mxu0 0.0
    %1123 = vmatprep.subr.mxu0 0.0
    %1124 = vmatpush1.msra.mxu0 0.0
    %1125 = vmatprep.subr.mxu0 0.0
    %1126 = vmatpush1.msra.mxu0 0.0
    %1127 = vmatprep.mubr.f32.mxu0 0.0
    %1128 = vmatmul.mubr.f32.gmra.mrb[0].mxu0 %v1061
    %v1129 = vpop.f32.mrb[0].mxu0
    %v1130 = vadd.f32 0.0, %v1129
    %v1131 = vpop.f32.mrb[0].mxu0
    %v1132 = vadd.f32 0.0, %v1131
    %1133 = vdwg.mxu0
    %v1134 = vadd.f32 %v1058, %v1130
    %v1135 = vadd.f32 %v1059, %v1132
    %v1136 = vmul.f32 %v1134, 0.5
    %v1137 = vmul.f32 %v1135, 0.5
    %v1138 = vtanh.pop %v1136
    %v1139 = vtanh.pop %v1137
    %v1140 = vmul.f32 %v1138, 0.5
    %v1141 = vmul.f32 %v1139, 0.5
    %v1142 = vadd.f32 %v1140, 0.5
    %v1143 = vadd.f32 %v1141, 0.5
    %v1144 = vtanh.pop %v1135
    %v1145 = vmul.f32 %v1142, %v1051
    %1147 = vrot.lane.b32.xlu0 %v1144, 64
    %v1148 = vpop.permute.xlu0 %1147
    %v1150 = vmul.f32 %v1142, %v1148
    %1152 = vrot.lane.b32.xlu0 %v1150, 64
    %v1153 = vpop.permute.xlu0 %1152
    %v1155 = vadd.f32 %v1145, %v1153
    %v1156 = vtanh.pop %v1155
    %1158 = vrot.lane.b32.xlu0 %v1156, 64
    %v1159 = vpop.permute.xlu0 %1158
    %v1161 = vmul.f32 %v1143, %v1159
    %v1162 = vld [vmem:[#allocation2 + $0x70] sm:$0xff]
    %v1163 = vld [vmem:[#allocation2 + $0x78] sm:$0xff]
    %v1165 = vsel %vm435, %v1161, 0
    %1167 = vmatprep.subr.mxu0 %v420
    %1168 = vmatpush1.msra.mxu0 %v419
    %1169 = vmatprep.subr.mxu0 %v422
    %1170 = vmatpush1.msra.mxu0 %v421
    %1171 = vmatprep.subr.mxu0 %v424
    %1172 = vmatpush1.msra.mxu0 %v423
    %1173 = vmatprep.subr.mxu0 %v426
    %1174 = vmatpush1.msra.mxu0 %v425
    %1175 = vmatprep.subr.mxu0 %v428
    %1176 = vmatpush1.msra.mxu0 %v427
    %1177 = vmatprep.subr.mxu0 %v430
    %1178 = vmatpush1.msra.mxu0 %v429
    %1179 = vmatprep.subr.mxu0 %v432
    %1180 = vmatpush1.msra.mxu0 %v431
    %1181 = vmatprep.subr.mxu0 %v434
    %1182 = vmatpush1.msra.mxu0 %v433
    %1183 = vmatprep.subr.mxu0 0.0
    %1184 = vmatpush1.msra.mxu0 0.0
    %1185 = vmatprep.subr.mxu0 0.0
    %1186 = vmatpush1.msra.mxu0 0.0
    %1187 = vmatprep.subr.mxu0 0.0
    %1188 = vmatpush1.msra.mxu0 0.0
    %1189 = vmatprep.subr.mxu0 0.0
    %1190 = vmatpush1.msra.mxu0 0.0
    %1191 = vmatprep.subr.mxu0 0.0
    %1192 = vmatpush1.msra.mxu0 0.0
    %1193 = vmatprep.subr.mxu0 0.0
    %1194 = vmatpush1.msra.mxu0 0.0
    %1195 = vmatprep.subr.mxu0 0.0
    %1196 = vmatpush1.msra.mxu0 0.0
    %1197 = vmatprep.subr.mxu0 0.0
    %1198 = vmatpush1.msra.mxu0 0.0
    %1199 = vmatprep.subr.mxu0 0.0
    %1200 = vmatpush1.msra.mxu0 0.0
    %1201 = vmatprep.subr.mxu0 0.0
    %1202 = vmatpush1.msra.mxu0 0.0
    %1203 = vmatprep.subr.mxu0 0.0
    %1204 = vmatpush1.msra.mxu0 0.0
    %1205 = vmatprep.subr.mxu0 0.0
    %1206 = vmatpush1.msra.mxu0 0.0
    %1207 = vmatprep.subr.mxu0 0.0
    %1208 = vmatpush1.msra.mxu0 0.0
    %1209 = vmatprep.subr.mxu0 0.0
    %1210 = vmatpush1.msra.mxu0 0.0
    %1211 = vmatprep.subr.mxu0 0.0
    %1212 = vmatpush1.msra.mxu0 0.0
    %1213 = vmatprep.subr.mxu0 0.0
    %1214 = vmatpush1.msra.mxu0 0.0
    %1215 = vmatprep.subr.mxu0 0.0
    %1216 = vmatpush1.msra.mxu0 0.0
    %1217 = vmatprep.subr.mxu0 0.0
    %1218 = vmatpush1.msra.mxu0 0.0
    %1219 = vmatprep.subr.mxu0 0.0
    %1220 = vmatpush1.msra.mxu0 0.0
    %1221 = vmatprep.subr.mxu0 0.0
    %1222 = vmatpush1.msra.mxu0 0.0
    %1223 = vmatprep.subr.mxu0 0.0
    %1224 = vmatpush1.msra.mxu0 0.0
    %1225 = vmatprep.subr.mxu0 0.0
    %1226 = vmatpush1.msra.mxu0 0.0
    %1227 = vmatprep.subr.mxu0 0.0
    %1228 = vmatpush1.msra.mxu0 0.0
    %1229 = vmatprep.subr.mxu0 0.0
    %1230 = vmatpush1.msra.mxu0 0.0
    %1231 = vmatprep.mubr.f32.mxu0 0.0
    %1232 = vmatmul.mubr.f32.gmra.mrb[0].mxu0 %v1165
    %v1233 = vpop.f32.mrb[0].mxu0
    %v1234 = vadd.f32 0.0, %v1233
    %v1235 = vpop.f32.mrb[0].mxu0
    %v1236 = vadd.f32 0.0, %v1235
    %1237 = vdwg.mxu0
    %v1238 = vadd.f32 %v1162, %v1234
    %v1239 = vadd.f32 %v1163, %v1236
    %v1240 = vmul.f32 %v1238, 0.5
    %v1241 = vmul.f32 %v1239, 0.5
    %v1242 = vtanh.pop %v1240
    %v1243 = vtanh.pop %v1241
    %v1244 = vmul.f32 %v1242, 0.5
    %v1245 = vmul.f32 %v1243, 0.5
    %v1246 = vadd.f32 %v1244, 0.5
    %v1247 = vadd.f32 %v1245, 0.5
    %v1248 = vtanh.pop %v1239
    %v1249 = vmul.f32 %v1246, %v1155
    %1251 = vrot.lane.b32.xlu0 %v1248, 64
    %v1252 = vpop.permute.xlu0 %1251
    %v1254 = vmul.f32 %v1246, %v1252
    %1256 = vrot.lane.b32.xlu0 %v1254, 64
    %v1257 = vpop.permute.xlu0 %1256
    %v1259 = vadd.f32 %v1249, %v1257
    %v1260 = vtanh.pop %v1259
    %1262 = vrot.lane.b32.xlu0 %v1260, 64
    %v1263 = vpop.permute.xlu0 %1262
    %v1265 = vmul.f32 %v1247, %v1263
    %v1266 = vld [vmem:[#allocation5] sm:$0xff]
    %v1267 = vld [vmem:[#allocation5 + $0x8] sm:$0xff]
    %v1268 = vld [vmem:[#allocation5 + $0x10] sm:$0xff]
    %v1269 = vld [vmem:[#allocation5 + $0x18] sm:$0xff]
    %v1270 = vld [vmem:[#allocation5 + $0x20] sm:$0xff]
    %v1271 = vld [vmem:[#allocation5 + $0x28] sm:$0xff]
    %v1272 = vld [vmem:[#allocation5 + $0x30] sm:$0xff]
    %v1273 = vld [vmem:[#allocation5 + $0x38] sm:$0xff]
    %v1274 = vld [vmem:[%s5] sm:$0x1]
    %v1276 = vlaneseq
    %v1277 = vshrl.u32 %v1276, 7
    %v1278 = vsub.s32 0, %v1277
    %v1279 = vrot.slane %v1274, %v1278
    %v1282 = vsel %vm435, %v1265, 0
    %1284 = vmatprep.subr.mxu0 0.0
    %1285 = vmatpush1.msra.mxu0 %v1266
    %1286 = vmatprep.subr.mxu0 0.0
    %1287 = vmatpush1.msra.mxu0 %v1267
    %1288 = vmatprep.subr.mxu0 0.0
    %1289 = vmatpush1.msra.mxu0 %v1268
    %1290 = vmatprep.subr.mxu0 0.0
    %1291 = vmatpush1.msra.mxu0 %v1269
    %1292 = vmatprep.subr.mxu0 0.0
    %1293 = vmatpush1.msra.mxu0 %v1270
    %1294 = vmatprep.subr.mxu0 0.0
    %1295 = vmatpush1.msra.mxu0 %v1271
    %1296 = vmatprep.subr.mxu0 0.0
    %1297 = vmatpush1.msra.mxu0 %v1272
    %1298 = vmatprep.subr.mxu0 0.0
    %1299 = vmatpush1.msra.mxu0 %v1273
    %1300 = vmatprep.subr.mxu0 0.0
    %1301 = vmatpush1.msra.mxu0 0.0
    %1302 = vmatprep.subr.mxu0 0.0
    %1303 = vmatpush1.msra.mxu0 0.0
    %1304 = vmatprep.subr.mxu0 0.0
    %1305 = vmatpush1.msra.mxu0 0.0
    %1306 = vmatprep.subr.mxu0 0.0
    %1307 = vmatpush1.msra.mxu0 0.0
    %1308 = vmatprep.subr.mxu0 0.0
    %1309 = vmatpush1.msra.mxu0 0.0
    %1310 = vmatprep.subr.mxu0 0.0
    %1311 = vmatpush1.msra.mxu0 0.0
    %1312 = vmatprep.subr.mxu0 0.0
    %1313 = vmatpush1.msra.mxu0 0.0
    %1314 = vmatprep.subr.mxu0 0.0
    %1315 = vmatpush1.msra.mxu0 0.0
    %1316 = vmatprep.subr.mxu0 0.0
    %1317 = vmatpush1.msra.mxu0 0.0
    %1318 = vmatprep.subr.mxu0 0.0
    %1319 = vmatpush1.msra.mxu0 0.0
    %1320 = vmatprep.subr.mxu0 0.0
    %1321 = vmatpush1.msra.mxu0 0.0
    %1322 = vmatprep.subr.mxu0 0.0
    %1323 = vmatpush1.msra.mxu0 0.0
    %1324 = vmatprep.subr.mxu0 0.0
    %1325 = vmatpush1.msra.mxu0 0.0
    %1326 = vmatprep.subr.mxu0 0.0
    %1327 = vmatpush1.msra.mxu0 0.0
    %1328 = vmatprep.subr.mxu0 0.0
    %1329 = vmatpush1.msra.mxu0 0.0
    %1330 = vmatprep.subr.mxu0 0.0
    %1331 = vmatpush1.msra.mxu0 0.0
    %1332 = vmatprep.subr.mxu0 0.0
    %1333 = vmatpush1.msra.mxu0 0.0
    %1334 = vmatprep.subr.mxu0 0.0
    %1335 = vmatpush1.msra.mxu0 0.0
    %1336 = vmatprep.subr.mxu0 0.0
    %1337 = vmatpush1.msra.mxu0 0.0
    %1338 = vmatprep.subr.mxu0 0.0
    %1339 = vmatpush1.msra.mxu0 0.0
    %1340 = vmatprep.subr.mxu0 0.0
    %1341 = vmatpush1.msra.mxu0 0.0
    %1342 = vmatprep.subr.mxu0 0.0
    %1343 = vmatpush1.msra.mxu0 0.0
    %1344 = vmatprep.subr.mxu0 0.0
    %1345 = vmatpush1.msra.mxu0 0.0
    %1346 = vmatprep.subr.mxu0 0.0
    %1347 = vmatpush1.msra.mxu0 0.0
    %1348 = vmatprep.mubr.f32.mxu0 0.0
    %1349 = vmatmul.mubr.f32.gmra.mrb[0].mxu0 %v1282
    %v1350 = vpop.f32.mrb[0].mxu0
    %v1351 = vadd.f32 %v1279, %v1350
    %v1352 = vpop.f32.mrb[0].mxu0
    %1353 = vdwg.mxu0
    %1354 = vst [vmem:[%s6] sm:$0xff] %v1351
    // Predicated region
    $region34: #{sentiment_forward.1} parent=1 // pred_check
      _
    $region35: #{sentiment_forward.1} parent=1 // pred_check_branch
      %1356 = sbr.rel (0) target = $region37
    $region36: #{sentiment_forward.1} parent=1 // pred_region
      _
    $region37: #{sentiment_forward.1} parent=1 // pred_fallthru
      _
    // Predicated region
    $region38: #{sentiment_forward.1} parent=1 // pred_check
      _
    $region39: #{sentiment_forward.1} parent=1 // pred_check_branch
      %1358 = sbr.rel (0) target = $region41
    $region40: #{sentiment_forward.1} parent=1 // pred_region
      _
    $region41: #{sentiment_forward.1} parent=1 // pred_fallthru
      _
    %1359 = vsyncpa [#allocation4], 1
    %1360 = vsyncpa [#allocation6], 1

</llo_original>
